<compile_context>
chip_gen: v6e
topology: v6e:2x2x1
jax: 0.10.0
libtpu: 0.0.40
codegen_flags: <defaults>
</compile_context>

<pallas_src>
import numpy as np
import jax
import jax.numpy as jnp
from jax.experimental import pallas as pl
from jax.experimental.pallas import tpu as pltpu


# ----------------------------- elementwise helpers -----------------------------------------

def _erf(x):
    # Eigen/XLA f32 rational approximation of erf (the one XLA uses), ~f32-accurate,
    # i.e. it reproduces PyTorch's exact (erf-based) nn.GELU.  Kernel-only.
    x = jnp.clip(x, -4.0, 4.0)
    x2 = x * x
    p = x2 * (-2.72614225801306e-10) + 2.77068142495902e-08
    p = x2 * p + (-2.10102402082508e-06)
    p = x2 * p + (-5.69250639462346e-05)
    p = x2 * p + (-7.34990630326855e-04)
    p = x2 * p + (-2.95459980854025e-03)
    p = x2 * p + (-1.60960333262415e-02)
    p = x * p
    q = x2 * (-1.45660718464996e-05) + (-2.13374055278905e-04)
    q = x2 * q + (-1.68282697438203e-03)
    q = x2 * q + (-7.37332916720468e-03)
    q = x2 * q + (-1.42647390514189e-02)
    # division expressed via pl.reciprocal (exact) per review; approx=True would lose
    # too much accuracy for the erf-GELU match.
    return p * pl.reciprocal(q, approx=False)


def _gelu(x):  # exact (erf-based) GELU, kernel-only
    return 0.5 * x * (1.0 + _erf(x * 0.7071067811865475))


def _softplus(x):  # numerically stable softplus (wrapper / reference only)
    return jnp.maximum(x, 0.0) + jnp.log1p(jnp.exp(-jnp.abs(x)))


def _mish(x):  # torch nn.Mish (wrapper / reference only)
    return x * jnp.tanh(_softplus(x))


def bilinear_upsample_matrix(n_in, n_out):
    """1-D interpolation matrix matching nn.Upsample(mode='bilinear', align_corners=True)."""
    m = np.zeros((n_out, n_in), dtype=np.float32)
    if n_in == 1 or n_out == 1:
        m[:, 0] = 1.0
        return m
    scale = (n_in - 1) / (n_out - 1)
    for i in range(n_out):
        src = i * scale
        i0 = min(int(np.floor(src)), n_in - 1)
        i1 = min(i0 + 1, n_in - 1)
        frac = src - i0
        m[i, i0] += 1.0 - frac
        m[i, i1] += frac
    return m


def conv_tap_masks(H, W):
    """(9, H*W) 0/1 masks; tap t=(dh+1)*3+(dw+1) is valid at output (y,x) iff (y+dh, x+dw) in-bounds."""
    yy, xx = np.meshgrid(np.arange(H), np.arange(W), indexing="ij")
    rows = []
    for dh in (-1, 0, 1):
        for dw in (-1, 0, 1):
            valid = (yy + dh >= 0) & (yy + dh < H) & (xx + dw >= 0) & (xx + dw < W)
            rows.append(valid.reshape(-1))
    return np.stack(rows, axis=0).astype(np.float32)


# ----------------------------------- Pallas forward ----------------------------------------

def up_forward_pallas(x_nchw, skip_nchw, cond, params):
    """Pallas implementation of Up.forward.  Inputs/outputs use the PyTorch NCHW convention."""
    B, Cx, Hs, Ws = x_nchw.shape
    _, Cs, H, W = skip_nchw.shape
    assert (H, W) == (2 * Hs, 2 * Ws)
    Cin = Cx + Cs
    Cmid = params['w3'].shape[3]
    Cout = params['w4'].shape[3]
    HW = H * W
    HsWs = Hs * Ws

    # trace-time constants
    m_h = bilinear_upsample_matrix(Hs, H)
    m_w = bilinear_upsample_matrix(Ws, W)
    m_up_t = jnp.asarray(np.kron(m_h, m_w).T)       # (Hs*Ws, H*W): xu = x2d @ m_up_t
    masks9 = jnp.asarray(conv_tap_masks(H, W))      # (9, H*W)

    # glue: NCHW -> (B, C, H*W) is a pure reshape (spatial stays row-major -> lane dim).
    x_flat = x_nchw.reshape(B, Cx, HsWs).astype(jnp.float32)
    skip_flat = skip_nchw.reshape(B, Cs, HW).astype(jnp.float32)

    # FiLM cond-encoder (Mish -> Linear on (B, cond_dim)) hoisted out of the kernel; the
    # per-channel FiLM apply stays fused inside the kernel.
    emb = (jnp.dot(_mish(cond.astype(jnp.float32)), params['lw'].astype(jnp.float32))
           + params['lb'].astype(jnp.float32))                       # (B, 2*Cout)
    gamma_beta = jnp.stack([emb[:, :Cout], emb[:, Cout:]], axis=-1)  # (B, Cout, 2)

    # conv weights flattened for one im2col matmul per conv: (cout, 9*cin),
    # K ordered tap-major / cin-minor to match the kernel's patch concat order.
    def flat_w(w_hwio):  # (3,3,cin,cout) -> (cout, 9*cin)
        cout = w_hwio.shape[3]
        return jnp.transpose(w_hwio, (3, 0, 1, 2)).reshape(cout, -1).astype(jnp.float32)

    w1f = flat_w(params['w1'])
    w2f = flat_w(params['w2'])
    w3f = flat_w(params['w3'])
    w4f = flat_w(params['w4'])

    # all 8 GroupNorm affine vectors packed into one (P, 8) block (single tiny DMA).
    P = max(Cin, Cmid, Cout)

    def col(v, c):
        return jnp.pad(v.reshape(c, 1).astype(jnp.float32), ((0, P - c), (0, 0)))

    gn_pack = jnp.concatenate(
        [col(params['g1'], Cin), col(params['b1'], Cin),
         col(params['g2'], Cin), col(params['b2'], Cin),
         col(params['g3'], Cmid), col(params['b3'], Cmid),
         col(params['g4'], Cout), col(params['b4'], Cout)], axis=1)   # (P, 8)

    tap_offsets = [(dh, dw) for dh in (-1, 0, 1) for dw in (-1, 0, 1)]

    def kernel(x_ref, skip_ref, gb_ref, mup_ref, mask_ref,
               w1_ref, w2_ref, w3_ref, w4_ref, gn_ref, out_ref):
        masks = mask_ref[...]                                    # (9, HW)
        mask_rows = [masks[t:t + 1, :] for t in range(9)]        # hoisted, reused by all convs

        def conv3x3(h, wf):      # h: (cin, HW), wf: (cout, 9*cin) -> (cout, HW)
            taps = []
            for t, (dh, dw) in enumerate(tap_offsets):
                s = dh * W + dw
                if s == 0:
                    taps.append(h)                               # center tap: no shift/mask
                else:
                    sh = pltpu.roll(h, (-s) % HW, axis=1)        # XLU lane rotation
                    taps.append(sh * mask_rows[t])               # zero out-of-bounds taps
            patches = jnp.concatenate(taps, axis=0)              # (9*cin, HW) im2col
            return jnp.dot(wf, patches, preferred_element_type=jnp.float32)

        def full_sum(a):         # (C, HW) -> (1, 1)
            return jnp.sum(jnp.sum(a, axis=1, keepdims=True), axis=0, keepdims=True)

        def group_norm(h, g, b):  # GroupNorm(1, C): stats over all (C, H, W)
            n = h.shape[0] * h.shape[1]
            mu = full_sum(h) * (1.0 / n)
            xc = h - mu
            var = full_sum(xc * xc) * (1.0 / n)
            return xc * jax.lax.rsqrt(var + 1e-5) * g + b

        # 1) bilinear 2x upsample (align_corners=True) as one lane-dense matmul
        xu = jnp.dot(x_ref[0], mup_ref[...], preferred_element_type=jnp.float32)  # (Cx, HW)
        # 2) channel concat == torch.cat([skip_x, x], dim=1)   (one small sublane concat)
        h0 = jnp.concatenate([skip_ref[0], xu], axis=0)                            # (Cin, HW)

        gn = gn_ref[...]
        g1, b1 = gn[:Cin, 0:1], gn[:Cin, 1:2]
        g2, b2 = gn[:Cin, 2:3], gn[:Cin, 3:4]
        g3, b3 = gn[:Cmid, 4:5], gn[:Cmid, 5:6]
        g4, b4 = gn[:Cout, 6:7], gn[:Cout, 7:8]

        # DoubleConv(in, in, residual=True)
        h = conv3x3(h0, w1_ref[...])
        h = _gelu(group_norm(h, g1, b1))
        h = conv3x3(h, w2_ref[...])
        h = group_norm(h, g2, b2)
        h = _gelu(h0 + h)

        # DoubleConv(in, out, mid=in//2)
        h = conv3x3(h, w3_ref[...])
        h = _gelu(group_norm(h, g3, b3))
        h = conv3x3(h, w4_ref[...])
        h = group_norm(h, g4, b4)

        # FiLM apply: gamma * x + beta (per output channel)
        gb = gb_ref[0]                                           # (Cout, 2)
        out_ref[0] = gb[:, 0:1] * h + gb[:, 1:2]

    out_flat = pl.pallas_call(
        kernel,
        grid=(B,),
        in_specs=[
            pl.BlockSpec((1, Cx, HsWs), lambda b: (b, 0, 0)),
            pl.BlockSpec((1, Cs, HW), lambda b: (b, 0, 0)),
            pl.BlockSpec((1, Cout, 2), lambda b: (b, 0, 0)),
            pl.BlockSpec((HsWs, HW), lambda b: (0, 0)),
            pl.BlockSpec((9, HW), lambda b: (0, 0)),
            pl.BlockSpec(w1f.shape, lambda b: (0, 0)),
            pl.BlockSpec(w2f.shape, lambda b: (0, 0)),
            pl.BlockSpec(w3f.shape, lambda b: (0, 0)),
            pl.BlockSpec(w4f.shape, lambda b: (0, 0)),
            pl.BlockSpec((P, 8), lambda b: (0, 0)),
        ],
        out_specs=pl.BlockSpec((1, Cout, HW), lambda b: (b, 0, 0)),
        out_shape=jax.ShapeDtypeStruct((B, Cout, HW), jnp.float32),
        compiler_params=pltpu.CompilerParams(dimension_semantics=("parallel",)),
    )(x_flat, skip_flat, gamma_beta, m_up_t, masks9, w1f, w2f, w3f, w4f, gn_pack)

    # (B, Cout, H*W) -> NCHW is a pure reshape (no transpose needed).
    return out_flat.reshape(B, Cout, H, W)


# ------------------------------- pure-JAX reference (for checking) -------------------------

def up_forward_reference(x_nchw, skip_nchw, cond, params):
    hi = jax.lax.Precision.HIGHEST
    _, _, Hs, Ws = x_nchw.shape
    _, _, H, W = skip_nchw.shape
    m_h = jnp.asarray(bilinear_upsample_matrix(Hs, H))
    m_w = jnp.asarray(bilinear_upsample_matrix(Ws, W))

    x = jnp.transpose(x_nchw, (0, 2, 3, 1)).astype(jnp.float32)
    skip = jnp.transpose(skip_nchw, (0, 2, 3, 1)).astype(jnp.float32)
    xu = jnp.einsum('Hh,bhwc->bHwc', m_h, x, precision=hi)
    xu = jnp.einsum('Ww,bhwc->bhWc', m_w, xu, precision=hi)
    h0 = jnp.concatenate([skip, xu], axis=-1)

    def conv(h, w):
        return jax.lax.conv_general_dilated(
            h, w, (1, 1), 'SAME', dimension_numbers=('NHWC', 'HWIO', 'NHWC'), precision=hi)

    def gn(h, g, b):
        mu = jnp.mean(h, axis=(1, 2, 3), keepdims=True)
        var = jnp.mean((h - mu) ** 2, axis=(1, 2, 3), keepdims=True)
        return ((h - mu) * jax.lax.rsqrt(var + 1e-5) * g.reshape(1, 1, 1, -1)
                + b.reshape(1, 1, 1, -1))

    gelu = lambda v: jax.nn.gelu(v, approximate=False)   # PyTorch's exact erf GELU
    p = params
    h = conv(h0, p['w1']); h = gelu(gn(h, p['g1'], p['b1']))
    h = conv(h, p['w2']); h = gn(h, p['g2'], p['b2'])
    h = gelu(h0 + h)
    h = conv(h, p['w3']); h = gelu(gn(h, p['g3'], p['b3']))
    h = conv(h, p['w4']); h = gn(h, p['g4'], p['b4'])

    cout = p['w4'].shape[-1]
    emb = jnp.dot(_mish(cond.astype(jnp.float32)), p['lw'], precision=hi) + p['lb']
    gamma = emb[:, :cout][:, None, None, :]
    beta = emb[:, cout:][:, None, None, :]
    return jnp.transpose(gamma * h + beta, (0, 3, 1, 2))


if __name__ == "__main__":
    # Up(in_channels=8, out_channels=4, cond_dim=32):
    #   x (from below): (B, 4, 8, 8); skip_x: (B, 4, 16, 16) -> concat has in_channels=8.
    B, Cx, Hs, Ws = 2, 4, 8, 8
    Cs, cond_dim = 4, 32
    Cin = Cx + Cs            # in_channels = 8
    Cout = 4                 # out_channels
    Cmid = Cin // 2          # 4
    H, W = 2 * Hs, 2 * Ws

    keys = jax.random.split(jax.random.PRNGKey(0), 20)
    x = jax.random.normal(keys[0], (B, Cx, Hs, Ws), jnp.float32)
    skip_x = jax.random.normal(keys[1], (B, Cs, H, W), jnp.float32)
    cond = jax.random.normal(keys[2], (B, cond_dim), jnp.float32)

    def conv_w(k, cin, cout):   # stored as HWIO (PyTorch Conv2d weight is (cout, cin, 3, 3))
        return jax.random.normal(k, (3, 3, cin, cout), jnp.float32) / float(np.sqrt(9.0 * cin))

    params = {
        'w1': conv_w(keys[3], Cin, Cin),
        'g1': 1.0 + 0.1 * jax.random.normal(keys[4], (1, Cin), jnp.float32),
        'b1': 0.1 * jax.random.normal(keys[5], (1, Cin), jnp.float32),
        'w2': conv_w(keys[6], Cin, Cin),
        'g2': 1.0 + 0.1 * jax.random.normal(keys[7], (1, Cin), jnp.float32),
        'b2': 0.1 * jax.random.normal(keys[8], (1, Cin), jnp.float32),
        'w3': conv_w(keys[9], Cin, Cmid),
        'g3': 1.0 + 0.1 * jax.random.normal(keys[10], (1, Cmid), jnp.float32),
        'b3': 0.1 * jax.random.normal(keys[11], (1, Cmid), jnp.float32),
        'w4': conv_w(keys[12], Cmid, Cout),
        'g4': 1.0 + 0.1 * jax.random.normal(keys[13], (1, Cout), jnp.float32),
        'b4': 0.1 * jax.random.normal(keys[14], (1, Cout), jnp.float32),
        # nn.Linear(cond_dim, 2*out): stored transposed as (cond_dim, 2*out)
        'lw': jax.random.normal(keys[15], (cond_dim, 2 * Cout), jnp.float32) / float(np.sqrt(cond_dim)),
        'lb': 0.1 * jax.random.normal(keys[16], (1, 2 * Cout), jnp.float32),
    }

    out = jax.block_until_ready(up_forward_pallas(x, skip_x, cond, params))
    assert out.shape == (B, Cout, H, W), out.shape

    ref = jax.block_until_ready(up_forward_reference(x, skip_x, cond, params))
    err = float(jnp.max(jnp.abs(out - ref)))
    if not np.allclose(np.asarray(out), np.asarray(ref), atol=2e-3, rtol=2e-3):
        raise SystemExit(f"mismatch vs JAX reference, max abs err = {err}")
    print("KERNEL_OK")
</pallas_src>

<mosaic_0001>
module attributes {stable_mosaic.version = 11 : i64} {
  func.func @kernel(%arg0: i32, %arg1: memref<1x4x64xf32, #tpu.memory_space<vmem>>, %arg2: memref<1x4x256xf32, #tpu.memory_space<vmem>>, %arg3: memref<1x4x2xf32, #tpu.memory_space<vmem>>, %arg4: memref<64x256xf32, #tpu.memory_space<vmem>>, %arg5: memref<9x256xf32, #tpu.memory_space<vmem>>, %arg6: memref<8x72xf32, #tpu.memory_space<vmem>>, %arg7: memref<8x72xf32, #tpu.memory_space<vmem>>, %arg8: memref<4x72xf32, #tpu.memory_space<vmem>>, %arg9: memref<4x36xf32, #tpu.memory_space<vmem>>, %arg10: memref<8x8xf32, #tpu.memory_space<vmem>>, %arg11: memref<1x4x256xf32, #tpu.memory_space<vmem>>) attributes {dimension_semantics = [#tpu.dimension_semantics<parallel>], iteration_bounds = array<i64: 2>, scalar_prefetch = 0 : i64, scratch_operands = 0 : i64, tpu.core_type = #tpu.core_type<tc>, window_params = [{transform_indices = @transform_0, window_bounds = array<i64: 1, 4, 64>}, {transform_indices = @transform_1, window_bounds = array<i64: 1, 4, 256>}, {transform_indices = @transform_2, window_bounds = array<i64: 1, 4, 2>}, {pipeline_mode = #tpu.pipeline_mode<synchronous>, transform_indices = @transform_3, window_bounds = array<i64: 64, 256>}, {pipeline_mode = #tpu.pipeline_mode<synchronous>, transform_indices = @transform_4, window_bounds = array<i64: 9, 256>}, {pipeline_mode = #tpu.pipeline_mode<synchronous>, transform_indices = @transform_5, window_bounds = array<i64: 8, 72>}, {pipeline_mode = #tpu.pipeline_mode<synchronous>, transform_indices = @transform_6, window_bounds = array<i64: 8, 72>}, {pipeline_mode = #tpu.pipeline_mode<synchronous>, transform_indices = @transform_7, window_bounds = array<i64: 4, 72>}, {pipeline_mode = #tpu.pipeline_mode<synchronous>, transform_indices = @transform_8, window_bounds = array<i64: 4, 36>}, {pipeline_mode = #tpu.pipeline_mode<synchronous>, transform_indices = @transform_9, window_bounds = array<i64: 8, 8>}, {transform_indices = @transform_10, window_bounds = array<i64: 1, 4, 256>}]} {
    %c0 = arith.constant 0 : index
    %c0_0 = arith.constant 0 : index
    %0 = vector.load %arg5[%c0, %c0_0] : memref<9x256xf32, #tpu.memory_space<vmem>>, vector<9x256xf32>
    %1 = vector.extract_strided_slice %0 {offsets = [0, 0], sizes = [1, 256], strides = [1, 1]} : vector<9x256xf32> to vector<1x256xf32>
    %2 = vector.extract_strided_slice %0 {offsets = [1, 0], sizes = [1, 256], strides = [1, 1]} : vector<9x256xf32> to vector<1x256xf32>
    %3 = vector.extract_strided_slice %0 {offsets = [2, 0], sizes = [1, 256], strides = [1, 1]} : vector<9x256xf32> to vector<1x256xf32>
    %4 = vector.extract_strided_slice %0 {offsets = [3, 0], sizes = [1, 256], strides = [1, 1]} : vector<9x256xf32> to vector<1x256xf32>
    %5 = vector.extract_strided_slice %0 {offsets = [5, 0], sizes = [1, 256], strides = [1, 1]} : vector<9x256xf32> to vector<1x256xf32>
    %6 = vector.extract_strided_slice %0 {offsets = [6, 0], sizes = [1, 256], strides = [1, 1]} : vector<9x256xf32> to vector<1x256xf32>
    %7 = vector.extract_strided_slice %0 {offsets = [7, 0], sizes = [1, 256], strides = [1, 1]} : vector<9x256xf32> to vector<1x256xf32>
    %8 = vector.extract_strided_slice %0 {offsets = [8, 0], sizes = [1, 256], strides = [1, 1]} : vector<9x256xf32> to vector<1x256xf32>
    %c0_1 = arith.constant 0 : index
    %c0_2 = arith.constant 0 : index
    %c0_3 = arith.constant 0 : index
    %9 = vector.load %arg1[%c0_1, %c0_2, %c0_3] : memref<1x4x64xf32, #tpu.memory_space<vmem>>, vector<1x4x64xf32>
    %10 = vector.shape_cast %9 : vector<1x4x64xf32> to vector<4x64xf32>
    %c0_4 = arith.constant 0 : index
    %c0_5 = arith.constant 0 : index
    %11 = vector.load %arg4[%c0_4, %c0_5] : memref<64x256xf32, #tpu.memory_space<vmem>>, vector<64x256xf32>
    %cst = arith.constant dense<0.000000e+00> : vector<4x256xf32>
    %12 = tpu.matmul %10, %11, %cst {dimension_numbers = #tpu.dot_dimension_numbers<[1], [0], [0], [1], [0, 0, 1, 1], [], []>} : vector<4x64xf32>, vector<64x256xf32>, vector<4x256xf32> -> vector<4x256xf32>
    %c0_6 = arith.constant 0 : index
    %c0_7 = arith.constant 0 : index
    %c0_8 = arith.constant 0 : index
    %13 = vector.load %arg2[%c0_6, %c0_7, %c0_8] : memref<1x4x256xf32, #tpu.memory_space<vmem>>, vector<1x4x256xf32>
    %14 = vector.shape_cast %13 : vector<1x4x256xf32> to vector<4x256xf32>
    %15 = tpu.concatenate %14, %12 in 0 : vector<4x256xf32>, vector<4x256xf32> -> vector<8x256xf32>
    %c0_9 = arith.constant 0 : index
    %c0_10 = arith.constant 0 : index
    %16 = vector.load %arg10[%c0_9, %c0_10] : memref<8x8xf32, #tpu.memory_space<vmem>>, vector<8x8xf32>
    %17 = vector.extract_strided_slice %16 {offsets = [0, 0], sizes = [8, 1], strides = [1, 1]} : vector<8x8xf32> to vector<8x1xf32>
    %18 = vector.extract_strided_slice %16 {offsets = [0, 1], sizes = [8, 1], strides = [1, 1]} : vector<8x8xf32> to vector<8x1xf32>
    %19 = vector.extract_strided_slice %16 {offsets = [0, 2], sizes = [8, 1], strides = [1, 1]} : vector<8x8xf32> to vector<8x1xf32>
    %20 = vector.extract_strided_slice %16 {offsets = [0, 3], sizes = [8, 1], strides = [1, 1]} : vector<8x8xf32> to vector<8x1xf32>
    %21 = vector.extract_strided_slice %16 {offsets = [0, 4], sizes = [4, 1], strides = [1, 1]} : vector<8x8xf32> to vector<4x1xf32>
    %22 = vector.extract_strided_slice %16 {offsets = [0, 5], sizes = [4, 1], strides = [1, 1]} : vector<8x8xf32> to vector<4x1xf32>
    %23 = vector.extract_strided_slice %16 {offsets = [0, 6], sizes = [4, 1], strides = [1, 1]} : vector<8x8xf32> to vector<4x1xf32>
    %24 = vector.extract_strided_slice %16 {offsets = [0, 7], sizes = [4, 1], strides = [1, 1]} : vector<8x8xf32> to vector<4x1xf32>
    %c0_11 = arith.constant 0 : index
    %c0_12 = arith.constant 0 : index
    %25 = vector.load %arg6[%c0_11, %c0_12] : memref<8x72xf32, #tpu.memory_space<vmem>>, vector<8x72xf32>
    %c17_i32 = arith.constant 17 : i32
    %26 = tpu.dynamic_rotate %15 by %c17_i32 dim 1 : vector<8x256xf32>, i32 -> vector<8x256xf32>
    %27 = vector.broadcast %1 : vector<1x256xf32> to vector<8x256xf32>
    %28 = arith.mulf %26, %27 : vector<8x256xf32>
    %c16_i32 = arith.constant 16 : i32
    %29 = tpu.dynamic_rotate %15 by %c16_i32 dim 1 : vector<8x256xf32>, i32 -> vector<8x256xf32>
    %30 = vector.broadcast %2 : vector<1x256xf32> to vector<8x256xf32>
    %31 = arith.mulf %29, %30 : vector<8x256xf32>
    %c15_i32 = arith.constant 15 : i32
    %32 = tpu.dynamic_rotate %15 by %c15_i32 dim 1 : vector<8x256xf32>, i32 -> vector<8x256xf32>
    %33 = vector.broadcast %3 : vector<1x256xf32> to vector<8x256xf32>
    %34 = arith.mulf %32, %33 : vector<8x256xf32>
    %c1_i32 = arith.constant 1 : i32
    %35 = tpu.dynamic_rotate %15 by %c1_i32 dim 1 : vector<8x256xf32>, i32 -> vector<8x256xf32>
    %36 = vector.broadcast %4 : vector<1x256xf32> to vector<8x256xf32>
    %37 = arith.mulf %35, %36 : vector<8x256xf32>
    %c255_i32 = arith.constant 255 : i32
    %38 = tpu.dynamic_rotate %15 by %c255_i32 dim 1 : vector<8x256xf32>, i32 -> vector<8x256xf32>
    %39 = vector.broadcast %5 : vector<1x256xf32> to vector<8x256xf32>
    %40 = arith.mulf %38, %39 : vector<8x256xf32>
    %c241_i32 = arith.constant 241 : i32
    %41 = tpu.dynamic_rotate %15 by %c241_i32 dim 1 : vector<8x256xf32>, i32 -> vector<8x256xf32>
    %42 = vector.broadcast %6 : vector<1x256xf32> to vector<8x256xf32>
    %43 = arith.mulf %41, %42 : vector<8x256xf32>
    %c240_i32 = arith.constant 240 : i32
    %44 = tpu.dynamic_rotate %15 by %c240_i32 dim 1 : vector<8x256xf32>, i32 -> vector<8x256xf32>
    %45 = vector.broadcast %7 : vector<1x256xf32> to vector<8x256xf32>
    %46 = arith.mulf %44, %45 : vector<8x256xf32>
    %c239_i32 = arith.constant 239 : i32
    %47 = tpu.dynamic_rotate %15 by %c239_i32 dim 1 : vector<8x256xf32>, i32 -> vector<8x256xf32>
    %48 = vector.broadcast %8 : vector<1x256xf32> to vector<8x256xf32>
    %49 = arith.mulf %47, %48 : vector<8x256xf32>
    %50 = tpu.concatenate %28, %31, %34, %37, %15, %40, %43, %46, %49 in 0 : vector<8x256xf32>, vector<8x256xf32>, vector<8x256xf32>, vector<8x256xf32>, vector<8x256xf32>, vector<8x256xf32>, vector<8x256xf32>, vector<8x256xf32>, vector<8x256xf32> -> vector<72x256xf32>
    %cst_13 = arith.constant dense<0.000000e+00> : vector<8x256xf32>
    %51 = tpu.matmul %25, %50, %cst_13 {dimension_numbers = #tpu.dot_dimension_numbers<[1], [0], [0], [1], [0, 0, 1, 1], [], []>} : vector<8x72xf32>, vector<72x256xf32>, vector<8x256xf32> -> vector<8x256xf32>
    %cst_14 = arith.constant dense<0.000000e+00> : vector<8xf32>
    %52 = vector.multi_reduction <add>, %51, %cst_14 [1] : vector<8x256xf32> to vector<8xf32>
    %53 = vector.shape_cast %52 : vector<8xf32> to vector<8x1xf32>
    %cst_15 = arith.constant dense<0.000000e+00> : vector<1xf32>
    %54 = vector.multi_reduction <add>, %53, %cst_15 [0] : vector<8x1xf32> to vector<1xf32>
    %55 = vector.shape_cast %54 : vector<1xf32> to vector<1x1xf32>
    %cst_16 = arith.constant 4.8828125E-4 : f32
    %56 = vector.broadcast %cst_16 : f32 to vector<1x1xf32>
    %57 = arith.mulf %55, %56 : vector<1x1xf32>
    %58 = vector.broadcast %57 : vector<1x1xf32> to vector<8x256xf32>
    %59 = arith.subf %51, %58 : vector<8x256xf32>
    %60 = arith.mulf %59, %59 : vector<8x256xf32>
    %cst_17 = arith.constant dense<0.000000e+00> : vector<8xf32>
    %61 = vector.multi_reduction <add>, %60, %cst_17 [1] : vector<8x256xf32> to vector<8xf32>
    %62 = vector.shape_cast %61 : vector<8xf32> to vector<8x1xf32>
    %cst_18 = arith.constant dense<0.000000e+00> : vector<1xf32>
    %63 = vector.multi_reduction <add>, %62, %cst_18 [0] : vector<8x1xf32> to vector<1xf32>
    %64 = vector.shape_cast %63 : vector<1xf32> to vector<1x1xf32>
    %cst_19 = arith.constant 4.8828125E-4 : f32
    %65 = vector.broadcast %cst_19 : f32 to vector<1x1xf32>
    %66 = arith.mulf %64, %65 : vector<1x1xf32>
    %cst_20 = arith.constant 9.99999974E-6 : f32
    %67 = vector.broadcast %cst_20 : f32 to vector<1x1xf32>
    %68 = arith.addf %66, %67 : vector<1x1xf32>
    %69 = math.rsqrt %68 : vector<1x1xf32>
    %70 = vector.broadcast %69 : vector<1x1xf32> to vector<8x256xf32>
    %71 = arith.mulf %59, %70 : vector<8x256xf32>
    %72 = vector.broadcast %17 : vector<8x1xf32> to vector<8x256xf32>
    %73 = arith.mulf %71, %72 : vector<8x256xf32>
    %74 = vector.broadcast %18 : vector<8x1xf32> to vector<8x256xf32>
    %75 = arith.addf %73, %74 : vector<8x256xf32>
    %cst_21 = arith.constant 5.000000e-01 : f32
    %76 = vector.broadcast %cst_21 : f32 to vector<8x256xf32>
    %77 = arith.mulf %76, %75 : vector<8x256xf32>
    %cst_22 = arith.constant 0.707106769 : f32
    %78 = vector.broadcast %cst_22 : f32 to vector<8x256xf32>
    %79 = arith.mulf %75, %78 : vector<8x256xf32>
    %cst_23 = arith.constant -4.000000e+00 : f32
    %cst_24 = arith.constant 4.000000e+00 : f32
    %80 = vector.broadcast %cst_23 : f32 to vector<8x256xf32>
    %81 = arith.maximumf %80, %79 : vector<8x256xf32>
    %82 = vector.broadcast %cst_24 : f32 to vector<8x256xf32>
    %83 = arith.minimumf %82, %81 : vector<8x256xf32>
    %84 = arith.mulf %83, %83 : vector<8x256xf32>
    %cst_25 = arith.constant -2.72614237E-10 : f32
    %85 = vector.broadcast %cst_25 : f32 to vector<8x256xf32>
    %86 = arith.mulf %84, %85 : vector<8x256xf32>
    %cst_26 = arith.constant 2.77068146E-8 : f32
    %87 = vector.broadcast %cst_26 : f32 to vector<8x256xf32>
    %88 = arith.addf %86, %87 : vector<8x256xf32>
    %89 = arith.mulf %84, %88 : vector<8x256xf32>
    %cst_27 = arith.constant -2.10102394E-6 : f32
    %90 = vector.broadcast %cst_27 : f32 to vector<8x256xf32>
    %91 = arith.addf %89, %90 : vector<8x256xf32>
    %92 = arith.mulf %84, %91 : vector<8x256xf32>
    %cst_28 = arith.constant -5.69250624E-5 : f32
    %93 = vector.broadcast %cst_28 : f32 to vector<8x256xf32>
    %94 = arith.addf %92, %93 : vector<8x256xf32>
    %95 = arith.mulf %84, %94 : vector<8x256xf32>
    %cst_29 = arith.constant -7.34990637E-4 : f32
    %96 = vector.broadcast %cst_29 : f32 to vector<8x256xf32>
    %97 = arith.addf %95, %96 : vector<8x256xf32>
    %98 = arith.mulf %84, %97 : vector<8x256xf32>
    %cst_30 = arith.constant -2.954600e-03 : f32
    %99 = vector.broadcast %cst_30 : f32 to vector<8x256xf32>
    %100 = arith.addf %98, %99 : vector<8x256xf32>
    %101 = arith.mulf %84, %100 : vector<8x256xf32>
    %cst_31 = arith.constant -0.0160960332 : f32
    %102 = vector.broadcast %cst_31 : f32 to vector<8x256xf32>
    %103 = arith.addf %101, %102 : vector<8x256xf32>
    %104 = arith.mulf %83, %103 : vector<8x256xf32>
    %cst_32 = arith.constant -1.45660715E-5 : f32
    %105 = vector.broadcast %cst_32 : f32 to vector<8x256xf32>
    %106 = arith.mulf %84, %105 : vector<8x256xf32>
    %cst_33 = arith.constant -2.13374049E-4 : f32
    %107 = vector.broadcast %cst_33 : f32 to vector<8x256xf32>
    %108 = arith.addf %106, %107 : vector<8x256xf32>
    %109 = arith.mulf %84, %108 : vector<8x256xf32>
    %cst_34 = arith.constant -0.00168282702 : f32
    %110 = vector.broadcast %cst_34 : f32 to vector<8x256xf32>
    %111 = arith.addf %109, %110 : vector<8x256xf32>
    %112 = arith.mulf %84, %111 : vector<8x256xf32>
    %cst_35 = arith.constant -0.00737332925 : f32
    %113 = vector.broadcast %cst_35 : f32 to vector<8x256xf32>
    %114 = arith.addf %112, %113 : vector<8x256xf32>
    %115 = arith.mulf %84, %114 : vector<8x256xf32>
    %cst_36 = arith.constant -0.0142647391 : f32
    %116 = vector.broadcast %cst_36 : f32 to vector<8x256xf32>
    %117 = arith.addf %115, %116 : vector<8x256xf32>
    %118 = tpu.reciprocal %117 : vector<8x256xf32> -> vector<8x256xf32>
    %119 = arith.mulf %104, %118 : vector<8x256xf32>
    %cst_37 = arith.constant 1.000000e+00 : f32
    %120 = vector.broadcast %cst_37 : f32 to vector<8x256xf32>
    %121 = arith.addf %120, %119 : vector<8x256xf32>
    %122 = arith.mulf %77, %121 : vector<8x256xf32>
    %c0_38 = arith.constant 0 : index
    %c0_39 = arith.constant 0 : index
    %123 = vector.load %arg7[%c0_38, %c0_39] : memref<8x72xf32, #tpu.memory_space<vmem>>, vector<8x72xf32>
    %c17_i32_40 = arith.constant 17 : i32
    %124 = tpu.dynamic_rotate %122 by %c17_i32_40 dim 1 : vector<8x256xf32>, i32 -> vector<8x256xf32>
    %125 = vector.broadcast %1 : vector<1x256xf32> to vector<8x256xf32>
    %126 = arith.mulf %124, %125 : vector<8x256xf32>
    %c16_i32_41 = arith.constant 16 : i32
    %127 = tpu.dynamic_rotate %122 by %c16_i32_41 dim 1 : vector<8x256xf32>, i32 -> vector<8x256xf32>
    %128 = vector.broadcast %2 : vector<1x256xf32> to vector<8x256xf32>
    %129 = arith.mulf %127, %128 : vector<8x256xf32>
    %c15_i32_42 = arith.constant 15 : i32
    %130 = tpu.dynamic_rotate %122 by %c15_i32_42 dim 1 : vector<8x256xf32>, i32 -> vector<8x256xf32>
    %131 = vector.broadcast %3 : vector<1x256xf32> to vector<8x256xf32>
    %132 = arith.mulf %130, %131 : vector<8x256xf32>
    %c1_i32_43 = arith.constant 1 : i32
    %133 = tpu.dynamic_rotate %122 by %c1_i32_43 dim 1 : vector<8x256xf32>, i32 -> vector<8x256xf32>
    %134 = vector.broadcast %4 : vector<1x256xf32> to vector<8x256xf32>
    %135 = arith.mulf %133, %134 : vector<8x256xf32>
    %c255_i32_44 = arith.constant 255 : i32
    %136 = tpu.dynamic_rotate %122 by %c255_i32_44 dim 1 : vector<8x256xf32>, i32 -> vector<8x256xf32>
    %137 = vector.broadcast %5 : vector<1x256xf32> to vector<8x256xf32>
    %138 = arith.mulf %136, %137 : vector<8x256xf32>
    %c241_i32_45 = arith.constant 241 : i32
    %139 = tpu.dynamic_rotate %122 by %c241_i32_45 dim 1 : vector<8x256xf32>, i32 -> vector<8x256xf32>
    %140 = vector.broadcast %6 : vector<1x256xf32> to vector<8x256xf32>
    %141 = arith.mulf %139, %140 : vector<8x256xf32>
    %c240_i32_46 = arith.constant 240 : i32
    %142 = tpu.dynamic_rotate %122 by %c240_i32_46 dim 1 : vector<8x256xf32>, i32 -> vector<8x256xf32>
    %143 = vector.broadcast %7 : vector<1x256xf32> to vector<8x256xf32>
    %144 = arith.mulf %142, %143 : vector<8x256xf32>
    %c239_i32_47 = arith.constant 239 : i32
    %145 = tpu.dynamic_rotate %122 by %c239_i32_47 dim 1 : vector<8x256xf32>, i32 -> vector<8x256xf32>
    %146 = vector.broadcast %8 : vector<1x256xf32> to vector<8x256xf32>
    %147 = arith.mulf %145, %146 : vector<8x256xf32>
    %148 = tpu.concatenate %126, %129, %132, %135, %122, %138, %141, %144, %147 in 0 : vector<8x256xf32>, vector<8x256xf32>, vector<8x256xf32>, vector<8x256xf32>, vector<8x256xf32>, vector<8x256xf32>, vector<8x256xf32>, vector<8x256xf32>, vector<8x256xf32> -> vector<72x256xf32>
    %cst_48 = arith.constant dense<0.000000e+00> : vector<8x256xf32>
    %149 = tpu.matmul %123, %148, %cst_48 {dimension_numbers = #tpu.dot_dimension_numbers<[1], [0], [0], [1], [0, 0, 1, 1], [], []>} : vector<8x72xf32>, vector<72x256xf32>, vector<8x256xf32> -> vector<8x256xf32>
    %cst_49 = arith.constant dense<0.000000e+00> : vector<8xf32>
    %150 = vector.multi_reduction <add>, %149, %cst_49 [1] : vector<8x256xf32> to vector<8xf32>
    %151 = vector.shape_cast %150 : vector<8xf32> to vector<8x1xf32>
    %cst_50 = arith.constant dense<0.000000e+00> : vector<1xf32>
    %152 = vector.multi_reduction <add>, %151, %cst_50 [0] : vector<8x1xf32> to vector<1xf32>
    %153 = vector.shape_cast %152 : vector<1xf32> to vector<1x1xf32>
    %cst_51 = arith.constant 4.8828125E-4 : f32
    %154 = vector.broadcast %cst_51 : f32 to vector<1x1xf32>
    %155 = arith.mulf %153, %154 : vector<1x1xf32>
    %156 = vector.broadcast %155 : vector<1x1xf32> to vector<8x256xf32>
    %157 = arith.subf %149, %156 : vector<8x256xf32>
    %158 = arith.mulf %157, %157 : vector<8x256xf32>
    %cst_52 = arith.constant dense<0.000000e+00> : vector<8xf32>
    %159 = vector.multi_reduction <add>, %158, %cst_52 [1] : vector<8x256xf32> to vector<8xf32>
    %160 = vector.shape_cast %159 : vector<8xf32> to vector<8x1xf32>
    %cst_53 = arith.constant dense<0.000000e+00> : vector<1xf32>
    %161 = vector.multi_reduction <add>, %160, %cst_53 [0] : vector<8x1xf32> to vector<1xf32>
    %162 = vector.shape_cast %161 : vector<1xf32> to vector<1x1xf32>
    %cst_54 = arith.constant 4.8828125E-4 : f32
    %163 = vector.broadcast %cst_54 : f32 to vector<1x1xf32>
    %164 = arith.mulf %162, %163 : vector<1x1xf32>
    %cst_55 = arith.constant 9.99999974E-6 : f32
    %165 = vector.broadcast %cst_55 : f32 to vector<1x1xf32>
    %166 = arith.addf %164, %165 : vector<1x1xf32>
    %167 = math.rsqrt %166 : vector<1x1xf32>
    %168 = vector.broadcast %167 : vector<1x1xf32> to vector<8x256xf32>
    %169 = arith.mulf %157, %168 : vector<8x256xf32>
    %170 = vector.broadcast %19 : vector<8x1xf32> to vector<8x256xf32>
    %171 = arith.mulf %169, %170 : vector<8x256xf32>
    %172 = vector.broadcast %20 : vector<8x1xf32> to vector<8x256xf32>
    %173 = arith.addf %171, %172 : vector<8x256xf32>
    %174 = arith.addf %15, %173 : vector<8x256xf32>
    %cst_56 = arith.constant 5.000000e-01 : f32
    %175 = vector.broadcast %cst_56 : f32 to vector<8x256xf32>
    %176 = arith.mulf %175, %174 : vector<8x256xf32>
    %cst_57 = arith.constant 0.707106769 : f32
    %177 = vector.broadcast %cst_57 : f32 to vector<8x256xf32>
    %178 = arith.mulf %174, %177 : vector<8x256xf32>
    %cst_58 = arith.constant -4.000000e+00 : f32
    %cst_59 = arith.constant 4.000000e+00 : f32
    %179 = vector.broadcast %cst_58 : f32 to vector<8x256xf32>
    %180 = arith.maximumf %179, %178 : vector<8x256xf32>
    %181 = vector.broadcast %cst_59 : f32 to vector<8x256xf32>
    %182 = arith.minimumf %181, %180 : vector<8x256xf32>
    %183 = arith.mulf %182, %182 : vector<8x256xf32>
    %cst_60 = arith.constant -2.72614237E-10 : f32
    %184 = vector.broadcast %cst_60 : f32 to vector<8x256xf32>
    %185 = arith.mulf %183, %184 : vector<8x256xf32>
    %cst_61 = arith.constant 2.77068146E-8 : f32
    %186 = vector.broadcast %cst_61 : f32 to vector<8x256xf32>
    %187 = arith.addf %185, %186 : vector<8x256xf32>
    %188 = arith.mulf %183, %187 : vector<8x256xf32>
    %cst_62 = arith.constant -2.10102394E-6 : f32
    %189 = vector.broadcast %cst_62 : f32 to vector<8x256xf32>
    %190 = arith.addf %188, %189 : vector<8x256xf32>
    %191 = arith.mulf %183, %190 : vector<8x256xf32>
    %cst_63 = arith.constant -5.69250624E-5 : f32
    %192 = vector.broadcast %cst_63 : f32 to vector<8x256xf32>
    %193 = arith.addf %191, %192 : vector<8x256xf32>
    %194 = arith.mulf %183, %193 : vector<8x256xf32>
    %cst_64 = arith.constant -7.34990637E-4 : f32
    %195 = vector.broadcast %cst_64 : f32 to vector<8x256xf32>
    %196 = arith.addf %194, %195 : vector<8x256xf32>
    %197 = arith.mulf %183, %196 : vector<8x256xf32>
    %cst_65 = arith.constant -2.954600e-03 : f32
    %198 = vector.broadcast %cst_65 : f32 to vector<8x256xf32>
    %199 = arith.addf %197, %198 : vector<8x256xf32>
    %200 = arith.mulf %183, %199 : vector<8x256xf32>
    %cst_66 = arith.constant -0.0160960332 : f32
    %201 = vector.broadcast %cst_66 : f32 to vector<8x256xf32>
    %202 = arith.addf %200, %201 : vector<8x256xf32>
    %203 = arith.mulf %182, %202 : vector<8x256xf32>
    %cst_67 = arith.constant -1.45660715E-5 : f32
    %204 = vector.broadcast %cst_67 : f32 to vector<8x256xf32>
    %205 = arith.mulf %183, %204 : vector<8x256xf32>
    %cst_68 = arith.constant -2.13374049E-4 : f32
    %206 = vector.broadcast %cst_68 : f32 to vector<8x256xf32>
    %207 = arith.addf %205, %206 : vector<8x256xf32>
    %208 = arith.mulf %183, %207 : vector<8x256xf32>
    %cst_69 = arith.constant -0.00168282702 : f32
    %209 = vector.broadcast %cst_69 : f32 to vector<8x256xf32>
    %210 = arith.addf %208, %209 : vector<8x256xf32>
    %211 = arith.mulf %183, %210 : vector<8x256xf32>
    %cst_70 = arith.constant -0.00737332925 : f32
    %212 = vector.broadcast %cst_70 : f32 to vector<8x256xf32>
    %213 = arith.addf %211, %212 : vector<8x256xf32>
    %214 = arith.mulf %183, %213 : vector<8x256xf32>
    %cst_71 = arith.constant -0.0142647391 : f32
    %215 = vector.broadcast %cst_71 : f32 to vector<8x256xf32>
    %216 = arith.addf %214, %215 : vector<8x256xf32>
    %217 = tpu.reciprocal %216 : vector<8x256xf32> -> vector<8x256xf32>
    %218 = arith.mulf %203, %217 : vector<8x256xf32>
    %cst_72 = arith.constant 1.000000e+00 : f32
    %219 = vector.broadcast %cst_72 : f32 to vector<8x256xf32>
    %220 = arith.addf %219, %218 : vector<8x256xf32>
    %221 = arith.mulf %176, %220 : vector<8x256xf32>
    %c0_73 = arith.constant 0 : index
    %c0_74 = arith.constant 0 : index
    %222 = vector.load %arg8[%c0_73, %c0_74] : memref<4x72xf32, #tpu.memory_space<vmem>>, vector<4x72xf32>
    %c17_i32_75 = arith.constant 17 : i32
    %223 = tpu.dynamic_rotate %221 by %c17_i32_75 dim 1 : vector<8x256xf32>, i32 -> vector<8x256xf32>
    %224 = vector.broadcast %1 : vector<1x256xf32> to vector<8x256xf32>
    %225 = arith.mulf %223, %224 : vector<8x256xf32>
    %c16_i32_76 = arith.constant 16 : i32
    %226 = tpu.dynamic_rotate %221 by %c16_i32_76 dim 1 : vector<8x256xf32>, i32 -> vector<8x256xf32>
    %227 = vector.broadcast %2 : vector<1x256xf32> to vector<8x256xf32>
    %228 = arith.mulf %226, %227 : vector<8x256xf32>
    %c15_i32_77 = arith.constant 15 : i32
    %229 = tpu.dynamic_rotate %221 by %c15_i32_77 dim 1 : vector<8x256xf32>, i32 -> vector<8x256xf32>
    %230 = vector.broadcast %3 : vector<1x256xf32> to vector<8x256xf32>
    %231 = arith.mulf %229, %230 : vector<8x256xf32>
    %c1_i32_78 = arith.constant 1 : i32
    %232 = tpu.dynamic_rotate %221 by %c1_i32_78 dim 1 : vector<8x256xf32>, i32 -> vector<8x256xf32>
    %233 = vector.broadcast %4 : vector<1x256xf32> to vector<8x256xf32>
    %234 = arith.mulf %232, %233 : vector<8x256xf32>
    %c255_i32_79 = arith.constant 255 : i32
    %235 = tpu.dynamic_rotate %221 by %c255_i32_79 dim 1 : vector<8x256xf32>, i32 -> vector<8x256xf32>
    %236 = vector.broadcast %5 : vector<1x256xf32> to vector<8x256xf32>
    %237 = arith.mulf %235, %236 : vector<8x256xf32>
    %c241_i32_80 = arith.constant 241 : i32
    %238 = tpu.dynamic_rotate %221 by %c241_i32_80 dim 1 : vector<8x256xf32>, i32 -> vector<8x256xf32>
    %239 = vector.broadcast %6 : vector<1x256xf32> to vector<8x256xf32>
    %240 = arith.mulf %238, %239 : vector<8x256xf32>
    %c240_i32_81 = arith.constant 240 : i32
    %241 = tpu.dynamic_rotate %221 by %c240_i32_81 dim 1 : vector<8x256xf32>, i32 -> vector<8x256xf32>
    %242 = vector.broadcast %7 : vector<1x256xf32> to vector<8x256xf32>
    %243 = arith.mulf %241, %242 : vector<8x256xf32>
    %c239_i32_82 = arith.constant 239 : i32
    %244 = tpu.dynamic_rotate %221 by %c239_i32_82 dim 1 : vector<8x256xf32>, i32 -> vector<8x256xf32>
    %245 = vector.broadcast %8 : vector<1x256xf32> to vector<8x256xf32>
    %246 = arith.mulf %244, %245 : vector<8x256xf32>
    %247 = tpu.concatenate %225, %228, %231, %234, %221, %237, %240, %243, %246 in 0 : vector<8x256xf32>, vector<8x256xf32>, vector<8x256xf32>, vector<8x256xf32>, vector<8x256xf32>, vector<8x256xf32>, vector<8x256xf32>, vector<8x256xf32>, vector<8x256xf32> -> vector<72x256xf32>
    %cst_83 = arith.constant dense<0.000000e+00> : vector<4x256xf32>
    %248 = tpu.matmul %222, %247, %cst_83 {dimension_numbers = #tpu.dot_dimension_numbers<[1], [0], [0], [1], [0, 0, 1, 1], [], []>} : vector<4x72xf32>, vector<72x256xf32>, vector<4x256xf32> -> vector<4x256xf32>
    %cst_84 = arith.constant dense<0.000000e+00> : vector<4xf32>
    %249 = vector.multi_reduction <add>, %248, %cst_84 [1] : vector<4x256xf32> to vector<4xf32>
    %250 = vector.shape_cast %249 : vector<4xf32> to vector<4x1xf32>
    %cst_85 = arith.constant dense<0.000000e+00> : vector<1xf32>
    %251 = vector.multi_reduction <add>, %250, %cst_85 [0] : vector<4x1xf32> to vector<1xf32>
    %252 = vector.shape_cast %251 : vector<1xf32> to vector<1x1xf32>
    %cst_86 = arith.constant 9.765625E-4 : f32
    %253 = vector.broadcast %cst_86 : f32 to vector<1x1xf32>
    %254 = arith.mulf %252, %253 : vector<1x1xf32>
    %255 = vector.broadcast %254 : vector<1x1xf32> to vector<4x256xf32>
    %256 = arith.subf %248, %255 : vector<4x256xf32>
    %257 = arith.mulf %256, %256 : vector<4x256xf32>
    %cst_87 = arith.constant dense<0.000000e+00> : vector<4xf32>
    %258 = vector.multi_reduction <add>, %257, %cst_87 [1] : vector<4x256xf32> to vector<4xf32>
    %259 = vector.shape_cast %258 : vector<4xf32> to vector<4x1xf32>
    %cst_88 = arith.constant dense<0.000000e+00> : vector<1xf32>
    %260 = vector.multi_reduction <add>, %259, %cst_88 [0] : vector<4x1xf32> to vector<1xf32>
    %261 = vector.shape_cast %260 : vector<1xf32> to vector<1x1xf32>
    %cst_89 = arith.constant 9.765625E-4 : f32
    %262 = vector.broadcast %cst_89 : f32 to vector<1x1xf32>
    %263 = arith.mulf %261, %262 : vector<1x1xf32>
    %cst_90 = arith.constant 9.99999974E-6 : f32
    %264 = vector.broadcast %cst_90 : f32 to vector<1x1xf32>
    %265 = arith.addf %263, %264 : vector<1x1xf32>
    %266 = math.rsqrt %265 : vector<1x1xf32>
    %267 = vector.broadcast %266 : vector<1x1xf32> to vector<4x256xf32>
    %268 = arith.mulf %256, %267 : vector<4x256xf32>
    %269 = vector.broadcast %21 : vector<4x1xf32> to vector<4x256xf32>
    %270 = arith.mulf %268, %269 : vector<4x256xf32>
    %271 = vector.broadcast %22 : vector<4x1xf32> to vector<4x256xf32>
    %272 = arith.addf %270, %271 : vector<4x256xf32>
    %cst_91 = arith.constant 5.000000e-01 : f32
    %273 = vector.broadcast %cst_91 : f32 to vector<4x256xf32>
    %274 = arith.mulf %273, %272 : vector<4x256xf32>
    %cst_92 = arith.constant 0.707106769 : f32
    %275 = vector.broadcast %cst_92 : f32 to vector<4x256xf32>
    %276 = arith.mulf %272, %275 : vector<4x256xf32>
    %cst_93 = arith.constant -4.000000e+00 : f32
    %cst_94 = arith.constant 4.000000e+00 : f32
    %277 = vector.broadcast %cst_93 : f32 to vector<4x256xf32>
    %278 = arith.maximumf %277, %276 : vector<4x256xf32>
    %279 = vector.broadcast %cst_94 : f32 to vector<4x256xf32>
    %280 = arith.minimumf %279, %278 : vector<4x256xf32>
    %281 = arith.mulf %280, %280 : vector<4x256xf32>
    %cst_95 = arith.constant -2.72614237E-10 : f32
    %282 = vector.broadcast %cst_95 : f32 to vector<4x256xf32>
    %283 = arith.mulf %281, %282 : vector<4x256xf32>
    %cst_96 = arith.constant 2.77068146E-8 : f32
    %284 = vector.broadcast %cst_96 : f32 to vector<4x256xf32>
    %285 = arith.addf %283, %284 : vector<4x256xf32>
    %286 = arith.mulf %281, %285 : vector<4x256xf32>
    %cst_97 = arith.constant -2.10102394E-6 : f32
    %287 = vector.broadcast %cst_97 : f32 to vector<4x256xf32>
    %288 = arith.addf %286, %287 : vector<4x256xf32>
    %289 = arith.mulf %281, %288 : vector<4x256xf32>
    %cst_98 = arith.constant -5.69250624E-5 : f32
    %290 = vector.broadcast %cst_98 : f32 to vector<4x256xf32>
    %291 = arith.addf %289, %290 : vector<4x256xf32>
    %292 = arith.mulf %281, %291 : vector<4x256xf32>
    %cst_99 = arith.constant -7.34990637E-4 : f32
    %293 = vector.broadcast %cst_99 : f32 to vector<4x256xf32>
    %294 = arith.addf %292, %293 : vector<4x256xf32>
    %295 = arith.mulf %281, %294 : vector<4x256xf32>
    %cst_100 = arith.constant -2.954600e-03 : f32
    %296 = vector.broadcast %cst_100 : f32 to vector<4x256xf32>
    %297 = arith.addf %295, %296 : vector<4x256xf32>
    %298 = arith.mulf %281, %297 : vector<4x256xf32>
    %cst_101 = arith.constant -0.0160960332 : f32
    %299 = vector.broadcast %cst_101 : f32 to vector<4x256xf32>
    %300 = arith.addf %298, %299 : vector<4x256xf32>
    %301 = arith.mulf %280, %300 : vector<4x256xf32>
    %cst_102 = arith.constant -1.45660715E-5 : f32
    %302 = vector.broadcast %cst_102 : f32 to vector<4x256xf32>
    %303 = arith.mulf %281, %302 : vector<4x256xf32>
    %cst_103 = arith.constant -2.13374049E-4 : f32
    %304 = vector.broadcast %cst_103 : f32 to vector<4x256xf32>
    %305 = arith.addf %303, %304 : vector<4x256xf32>
    %306 = arith.mulf %281, %305 : vector<4x256xf32>
    %cst_104 = arith.constant -0.00168282702 : f32
    %307 = vector.broadcast %cst_104 : f32 to vector<4x256xf32>
    %308 = arith.addf %306, %307 : vector<4x256xf32>
    %309 = arith.mulf %281, %308 : vector<4x256xf32>
    %cst_105 = arith.constant -0.00737332925 : f32
    %310 = vector.broadcast %cst_105 : f32 to vector<4x256xf32>
    %311 = arith.addf %309, %310 : vector<4x256xf32>
    %312 = arith.mulf %281, %311 : vector<4x256xf32>
    %cst_106 = arith.constant -0.0142647391 : f32
    %313 = vector.broadcast %cst_106 : f32 to vector<4x256xf32>
    %314 = arith.addf %312, %313 : vector<4x256xf32>
    %315 = tpu.reciprocal %314 : vector<4x256xf32> -> vector<4x256xf32>
    %316 = arith.mulf %301, %315 : vector<4x256xf32>
    %cst_107 = arith.constant 1.000000e+00 : f32
    %317 = vector.broadcast %cst_107 : f32 to vector<4x256xf32>
    %318 = arith.addf %317, %316 : vector<4x256xf32>
    %319 = arith.mulf %274, %318 : vector<4x256xf32>
    %c0_108 = arith.constant 0 : index
    %c0_109 = arith.constant 0 : index
    %320 = vector.load %arg9[%c0_108, %c0_109] : memref<4x36xf32, #tpu.memory_space<vmem>>, vector<4x36xf32>
    %c17_i32_110 = arith.constant 17 : i32
    %321 = tpu.dynamic_rotate %319 by %c17_i32_110 dim 1 : vector<4x256xf32>, i32 -> vector<4x256xf32>
    %322 = vector.broadcast %1 : vector<1x256xf32> to vector<4x256xf32>
    %323 = arith.mulf %321, %322 : vector<4x256xf32>
    %c16_i32_111 = arith.constant 16 : i32
    %324 = tpu.dynamic_rotate %319 by %c16_i32_111 dim 1 : vector<4x256xf32>, i32 -> vector<4x256xf32>
    %325 = vector.broadcast %2 : vector<1x256xf32> to vector<4x256xf32>
    %326 = arith.mulf %324, %325 : vector<4x256xf32>
    %c15_i32_112 = arith.constant 15 : i32
    %327 = tpu.dynamic_rotate %319 by %c15_i32_112 dim 1 : vector<4x256xf32>, i32 -> vector<4x256xf32>
    %328 = vector.broadcast %3 : vector<1x256xf32> to vector<4x256xf32>
    %329 = arith.mulf %327, %328 : vector<4x256xf32>
    %c1_i32_113 = arith.constant 1 : i32
    %330 = tpu.dynamic_rotate %319 by %c1_i32_113 dim 1 : vector<4x256xf32>, i32 -> vector<4x256xf32>
    %331 = vector.broadcast %4 : vector<1x256xf32> to vector<4x256xf32>
    %332 = arith.mulf %330, %331 : vector<4x256xf32>
    %c255_i32_114 = arith.constant 255 : i32
    %333 = tpu.dynamic_rotate %319 by %c255_i32_114 dim 1 : vector<4x256xf32>, i32 -> vector<4x256xf32>
    %334 = vector.broadcast %5 : vector<1x256xf32> to vector<4x256xf32>
    %335 = arith.mulf %333, %334 : vector<4x256xf32>
    %c241_i32_115 = arith.constant 241 : i32
    %336 = tpu.dynamic_rotate %319 by %c241_i32_115 dim 1 : vector<4x256xf32>, i32 -> vector<4x256xf32>
    %337 = vector.broadcast %6 : vector<1x256xf32> to vector<4x256xf32>
    %338 = arith.mulf %336, %337 : vector<4x256xf32>
    %c240_i32_116 = arith.constant 240 : i32
    %339 = tpu.dynamic_rotate %319 by %c240_i32_116 dim 1 : vector<4x256xf32>, i32 -> vector<4x256xf32>
    %340 = vector.broadcast %7 : vector<1x256xf32> to vector<4x256xf32>
    %341 = arith.mulf %339, %340 : vector<4x256xf32>
    %c239_i32_117 = arith.constant 239 : i32
    %342 = tpu.dynamic_rotate %319 by %c239_i32_117 dim 1 : vector<4x256xf32>, i32 -> vector<4x256xf32>
    %343 = vector.broadcast %8 : vector<1x256xf32> to vector<4x256xf32>
    %344 = arith.mulf %342, %343 : vector<4x256xf32>
    %345 = tpu.concatenate %323, %326, %329, %332, %319, %335, %338, %341, %344 in 0 : vector<4x256xf32>, vector<4x256xf32>, vector<4x256xf32>, vector<4x256xf32>, vector<4x256xf32>, vector<4x256xf32>, vector<4x256xf32>, vector<4x256xf32>, vector<4x256xf32> -> vector<36x256xf32>
    %cst_118 = arith.constant dense<0.000000e+00> : vector<4x256xf32>
    %346 = tpu.matmul %320, %345, %cst_118 {dimension_numbers = #tpu.dot_dimension_numbers<[1], [0], [0], [1], [0, 0, 1, 1], [], []>} : vector<4x36xf32>, vector<36x256xf32>, vector<4x256xf32> -> vector<4x256xf32>
    %cst_119 = arith.constant dense<0.000000e+00> : vector<4xf32>
    %347 = vector.multi_reduction <add>, %346, %cst_119 [1] : vector<4x256xf32> to vector<4xf32>
    %348 = vector.shape_cast %347 : vector<4xf32> to vector<4x1xf32>
    %cst_120 = arith.constant dense<0.000000e+00> : vector<1xf32>
    %349 = vector.multi_reduction <add>, %348, %cst_120 [0] : vector<4x1xf32> to vector<1xf32>
    %350 = vector.shape_cast %349 : vector<1xf32> to vector<1x1xf32>
    %cst_121 = arith.constant 9.765625E-4 : f32
    %351 = vector.broadcast %cst_121 : f32 to vector<1x1xf32>
    %352 = arith.mulf %350, %351 : vector<1x1xf32>
    %353 = vector.broadcast %352 : vector<1x1xf32> to vector<4x256xf32>
    %354 = arith.subf %346, %353 : vector<4x256xf32>
    %355 = arith.mulf %354, %354 : vector<4x256xf32>
    %cst_122 = arith.constant dense<0.000000e+00> : vector<4xf32>
    %356 = vector.multi_reduction <add>, %355, %cst_122 [1] : vector<4x256xf32> to vector<4xf32>
    %357 = vector.shape_cast %356 : vector<4xf32> to vector<4x1xf32>
    %cst_123 = arith.constant dense<0.000000e+00> : vector<1xf32>
    %358 = vector.multi_reduction <add>, %357, %cst_123 [0] : vector<4x1xf32> to vector<1xf32>
    %359 = vector.shape_cast %358 : vector<1xf32> to vector<1x1xf32>
    %cst_124 = arith.constant 9.765625E-4 : f32
    %360 = vector.broadcast %cst_124 : f32 to vector<1x1xf32>
    %361 = arith.mulf %359, %360 : vector<1x1xf32>
    %cst_125 = arith.constant 9.99999974E-6 : f32
    %362 = vector.broadcast %cst_125 : f32 to vector<1x1xf32>
    %363 = arith.addf %361, %362 : vector<1x1xf32>
    %364 = math.rsqrt %363 : vector<1x1xf32>
    %365 = vector.broadcast %364 : vector<1x1xf32> to vector<4x256xf32>
    %366 = arith.mulf %354, %365 : vector<4x256xf32>
    %367 = vector.broadcast %23 : vector<4x1xf32> to vector<4x256xf32>
    %368 = arith.mulf %366, %367 : vector<4x256xf32>
    %369 = vector.broadcast %24 : vector<4x1xf32> to vector<4x256xf32>
    %370 = arith.addf %368, %369 : vector<4x256xf32>
    %c0_126 = arith.constant 0 : index
    %c0_127 = arith.constant 0 : index
    %c0_128 = arith.constant 0 : index
    %371 = vector.load %arg3[%c0_126, %c0_127, %c0_128] : memref<1x4x2xf32, #tpu.memory_space<vmem>>, vector<1x4x2xf32>
    %372 = vector.shape_cast %371 : vector<1x4x2xf32> to vector<4x2xf32>
    %373 = vector.extract_strided_slice %372 {offsets = [0, 0], sizes = [4, 1], strides = [1, 1]} : vector<4x2xf32> to vector<4x1xf32>
    %374 = vector.broadcast %373 : vector<4x1xf32> to vector<4x256xf32>
    %375 = arith.mulf %374, %370 : vector<4x256xf32>
    %376 = vector.extract_strided_slice %372 {offsets = [0, 1], sizes = [4, 1], strides = [1, 1]} : vector<4x2xf32> to vector<4x1xf32>
    %377 = vector.broadcast %376 : vector<4x1xf32> to vector<4x256xf32>
    %378 = arith.addf %375, %377 : vector<4x256xf32>
    %c0_129 = arith.constant 0 : index
    %c0_130 = arith.constant 0 : index
    %c0_131 = arith.constant 0 : index
    %379 = vector.load %arg11[%c0_129, %c0_130, %c0_131] : memref<1x4x256xf32, #tpu.memory_space<vmem>>, vector<1x4x256xf32>
    %380 = vector.shape_cast %379 : vector<1x4x256xf32> to vector<4x256xf32>
    %381 = vector.shape_cast %378 : vector<4x256xf32> to vector<1x4x256xf32>
    tpu.vector_store %arg11[%c0_129, %c0_130, %c0_131], %381 {strides = array<i32>} : memref<1x4x256xf32, #tpu.memory_space<vmem>>, vector<1x4x256xf32>,
    return
  }
  func.func @transform_0(%arg0: i32) -> (i32, i32, i32) {
    %c0_i32 = arith.constant 0 : i32
    %c0_i32_0 = arith.constant 0 : i32
    %c0_i32_1 = arith.constant 0 : i32
    return %arg0, %c0_i32, %c0_i32_0 : i32, i32, i32
  }
  func.func @transform_1(%arg0: i32) -> (i32, i32, i32) {
    %c0_i32 = arith.constant 0 : i32
    %c0_i32_0 = arith.constant 0 : i32
    %c0_i32_1 = arith.constant 0 : i32
    return %arg0, %c0_i32, %c0_i32_0 : i32, i32, i32
  }
  func.func @transform_2(%arg0: i32) -> (i32, i32, i32) {
    %c0_i32 = arith.constant 0 : i32
    %c0_i32_0 = arith.constant 0 : i32
    %c0_i32_1 = arith.constant 0 : i32
    return %arg0, %c0_i32, %c0_i32_0 : i32, i32, i32
  }
  func.func @transform_3(%arg0: i32) -> (i32, i32) {
    %c0_i32 = arith.constant 0 : i32
    %c0_i32_0 = arith.constant 0 : i32
    %c0_i32_1 = arith.constant 0 : i32
    return %c0_i32, %c0_i32_0 : i32, i32
  }
  func.func @transform_4(%arg0: i32) -> (i32, i32) {
    %c0_i32 = arith.constant 0 : i32
    %c0_i32_0 = arith.constant 0 : i32
    %c0_i32_1 = arith.constant 0 : i32
    return %c0_i32, %c0_i32_0 : i32, i32
  }
  func.func @transform_5(%arg0: i32) -> (i32, i32) {
    %c0_i32 = arith.constant 0 : i32
    %c0_i32_0 = arith.constant 0 : i32
    %c0_i32_1 = arith.constant 0 : i32
    return %c0_i32, %c0_i32_0 : i32, i32
  }
  func.func @transform_6(%arg0: i32) -> (i32, i32) {
    %c0_i32 = arith.constant 0 : i32
    %c0_i32_0 = arith.constant 0 : i32
    %c0_i32_1 = arith.constant 0 : i32
    return %c0_i32, %c0_i32_0 : i32, i32
  }
  func.func @transform_7(%arg0: i32) -> (i32, i32) {
    %c0_i32 = arith.constant 0 : i32
    %c0_i32_0 = arith.constant 0 : i32
    %c0_i32_1 = arith.constant 0 : i32
    return %c0_i32, %c0_i32_0 : i32, i32
  }
  func.func @transform_8(%arg0: i32) -> (i32, i32) {
    %c0_i32 = arith.constant 0 : i32
    %c0_i32_0 = arith.constant 0 : i32
    %c0_i32_1 = arith.constant 0 : i32
    return %c0_i32, %c0_i32_0 : i32, i32
  }
  func.func @transform_9(%arg0: i32) -> (i32, i32) {
    %c0_i32 = arith.constant 0 : i32
    %c0_i32_0 = arith.constant 0 : i32
    %c0_i32_1 = arith.constant 0 : i32
    return %c0_i32, %c0_i32_0 : i32, i32
  }
  func.func @transform_10(%arg0: i32) -> (i32, i32, i32) {
    %c0_i32 = arith.constant 0 : i32
    %c0_i32_0 = arith.constant 0 : i32
    %c0_i32_1 = arith.constant 0 : i32
    return %arg0, %c0_i32, %c0_i32_0 : i32, i32, i32
  }
}

</mosaic_0001>

<llo_original>
// kernel: tpu_custom_call.1
$region0: #{tpu_custom_call.1}
  #allocation0 [shape = 'u32[]', space=smem, size = 0x4, offset = 0x4, fixed_abs, tag = 'smem constant byte address 0x4 - core index']
  #allocation1 [shape = 'u32[144,128]{1,0:T(1,128)}', space=vmem, size = 0x12000, scoped, tag = 'internal scratch']
  %s0 = inlined_call_operand.vmem [shape: f32[2,4,64], index: 0, kind: input, shape index: {}]
  %s1 = inlined_call_operand.hbm [shape: f32[2,4,256], index: 1, kind: input, shape index: {}]
  %s2 = inlined_call_operand.vmem [shape: f32[2,4,2], index: 2, kind: input, shape index: {}]
  %s3 = inlined_call_operand.hbm [shape: f32[64,256], index: 3, kind: input, shape index: {}]
  %s4 = inlined_call_operand.hbm [shape: f32[9,256], index: 4, kind: input, shape index: {}]
  %s5 = inlined_call_operand.vmem [shape: f32[8,72], index: 5, kind: input, shape index: {}]
  %s6 = inlined_call_operand.hbm [shape: f32[8,72], index: 6, kind: input, shape index: {}]
  %s7 = inlined_call_operand.hbm [shape: f32[4,72], index: 7, kind: input, shape index: {}]
  %s8 = inlined_call_operand.hbm [shape: f32[4,36], index: 8, kind: input, shape index: {}]
  %s9 = inlined_call_operand.vmem [shape: f32[8,8], index: 9, kind: input, shape index: {}]
  %s10 = inlined_call_operand.hbm [shape: f32[2,4,256], index: 10, kind: output, shape index: {}]
  %s11 = sld [smem:[#allocation0]]
  $region97: #{tpu_custom_call.1} parent=0
    _
  %s13 = ssub.s32 1, %s11
  %s14 = scalar_select 0, %s13, %s11
  $region1: #{tpu_custom_call.1} parent=0
    #allocation2 [shape = 'u8[8192]{0}', space=vmem, size = 0x2000, scoped, tag = 'input window, operand 1']
    #allocation3 [shape = 's32[2]{0}', space=sflag, size = 0x8, scoped, tag = 'scoped memory for tpu_custom_call.1']
    #allocation4 [shape = 's32[2]{0}', space=sflag, size = 0x8, scoped, tag = 'scoped memory for tpu_custom_call.1']
    #allocation5 [shape = 'u8[65536]{0}', space=vmem, size = 0x10000, scoped, tag = 'input window, operand 3, single buffered']
    #allocation6 [shape = 's32[1]{0}', space=sflag, size = 0x4, scoped, tag = 'scoped memory for tpu_custom_call.1']
    #allocation7 [shape = 'u8[16384]{0}', space=vmem, size = 0x4000, scoped, tag = 'input window, operand 4, single buffered']
    #allocation8 [shape = 'u8[4096]{0}', space=vmem, size = 0x1000, scoped, tag = 'input window, operand 6, single buffered']
    #allocation9 [shape = 's32[1]{0}', space=sflag, size = 0x4, scoped, tag = 'scoped memory for tpu_custom_call.1']
    #allocation10 [shape = 'u8[2048]{0}', space=vmem, size = 0x800, scoped, tag = 'input window, operand 7, single buffered']
    #allocation11 [shape = 'u8[2048]{0}', space=vmem, size = 0x800, scoped, tag = 'input window, operand 8, single buffered']
    #allocation12 [shape = 's32[1]{0}', space=sflag, size = 0x4, scoped, tag = 'scoped memory for tpu_custom_call.1']
    #allocation13 [shape = 'u8[8192]{0}', space=vmem, size = 0x2000, scoped, tag = 'output window, operand 0']
    %15 = vsyncpa [#allocation3], 0
    %s16 = scalar_lea.sflag [#allocation3], 1
    %17 = vsyncpa %s16, 0
    %18 = vsyncpa [#allocation6], 0
    %19 = vsyncpa [#allocation9], 0
    %20 = vsyncpa [#allocation12], 0
    %21 = vsyncpa [#allocation4], 0
    %s22 = scalar_lea.sflag [#allocation4], 1
    %23 = vsyncpa %s22, 0
    loop: start=0, step=1, limit=4
    $region2: #{tpu_custom_call.1} parent=1 // loop_pre_header
      _
    $region3: #{tpu_custom_call.1} parent=1 // loop_header
      %s25 = sphi 0, %s29
      %p26 = scmp.ge.s32.totalorder %s25, 4
      %s35 = sphi 0, %s37
      %s38 = sphi 0, %s35
      %s39 = sphi 0, %s38
      %s55 = sphi 0, %s39
      %s61 = sphi 0, %s63
      %s64 = sphi 0, %s61
      %s65 = sphi 0, %s64
      %s81 = sphi 0, %s65
      %s87 = sphi 0, %s89
      %s90 = sphi 0, %s87
      %s91 = sphi 0, %s90
      %s107 = sphi 0, %s91
      %s111 = sphi 0, %s111
      %s113 = sphi 0, %s111
      %s114 = sphi 0, %s113
      %s128 = sphi 0, %s114
      %s132 = sphi 0, %s132
      %s134 = sphi 0, %s132
      %s135 = sphi 0, %s134
      %s149 = sphi 0, %s135
      %s153 = sphi 0, %s153
      %s155 = sphi 0, %s153
      %s156 = sphi 0, %s155
      %s170 = sphi 0, %s156
      %s174 = sphi 0, %s174
      %s176 = sphi 0, %s174
      %s177 = sphi 0, %s176
      %s191 = sphi 0, %s177
      %s195 = sphi 0, %s195
      %s197 = sphi 0, %s195
      %s198 = sphi 0, %s197
      %s212 = sphi 0, %s198
      %s216 = sphi 0, %s216
      %s218 = sphi 0, %s216
      %s219 = sphi 0, %s218
      %s233 = sphi 0, %s219
      %s237 = sphi 0, %s237
      %s239 = sphi 0, %s237
      %s240 = sphi 0, %s239
      %s254 = sphi 0, %s240
      %s260 = sphi 0, %s262
      %s263 = sphi 0, %s260
      %s264 = sphi 0, %s263
      %s280 = sphi 0, %s264
    $region4: #{tpu_custom_call.1} parent=1 // loop_header_branch
      %28 = sbr.rel (%p26) target = $region8
    $region5: #{tpu_custom_call.1} parent=1 // loop_body
      %s30 = ssub.s32 %s25, 1
      %s31 = ssub.s32 %s25, 2
      %s32 = sadd.s32 %s25, 1
      %s33 = ssub.s32 %s25, %s32
      %p34 = scmp.eq.s32.totalorder %s33, 0
      %s36 = sadd.s32 %s35, 1
      %s37 = scalar_select %p34, %s35, %s36
      %p40 = pneg %p34
      %p41 = scmp.eq.s32.totalorder %s25, 1
      %p42 = por %p40, %p41
      %p43 = scmp.ne.s32.totalorder %s35, %s38
      %p44 = scmp.eq.s32.totalorder %s25, 0
      %p45 = por %p43, %p44
      %p46 = scmp.ne.s32.totalorder %s35, %s38
      %p47 = scmp.eq.s32.totalorder %s30, 1
      %p48 = por %p46, %p47
      %p49 = scmp.ne.s32.totalorder %s38, %s39
      %p50 = scmp.eq.s32.totalorder %s30, 0
      %p51 = por %p49, %p50
      %p52 = scmp.ne.s32.totalorder %s38, %s39
      %p53 = scmp.eq.s32.totalorder %s31, 1
      %p54 = por %p52, %p53
      %p56 = scmp.ne.s32.totalorder %s39, %s55
      %p57 = scmp.eq.s32.totalorder %s31, 0
      %p58 = por %p56, %p57
      %s59 = ssub.s32 %s25, %s32
      %p60 = scmp.eq.s32.totalorder %s59, 0
      %s62 = sadd.s32 %s61, 1
      %s63 = scalar_select %p60, %s61, %s62
      %p66 = pneg %p60
      %p67 = scmp.eq.s32.totalorder %s25, 1
      %p68 = por %p66, %p67
      %p69 = scmp.ne.s32.totalorder %s61, %s64
      %p70 = scmp.eq.s32.totalorder %s25, 0
      %p71 = por %p69, %p70
      %p72 = scmp.ne.s32.totalorder %s61, %s64
      %p73 = scmp.eq.s32.totalorder %s30, 1
      %p74 = por %p72, %p73
      %p75 = scmp.ne.s32.totalorder %s64, %s65
      %p76 = scmp.eq.s32.totalorder %s30, 0
      %p77 = por %p75, %p76
      %p78 = scmp.ne.s32.totalorder %s64, %s65
      %p79 = scmp.eq.s32.totalorder %s31, 1
      %p80 = por %p78, %p79
      %p82 = scmp.ne.s32.totalorder %s65, %s81
      %p83 = scmp.eq.s32.totalorder %s31, 0
      %p84 = por %p82, %p83
      %s85 = ssub.s32 %s25, %s32
      %p86 = scmp.eq.s32.totalorder %s85, 0
      %s88 = sadd.s32 %s87, 1
      %s89 = scalar_select %p86, %s87, %s88
      %p92 = pneg %p86
      %p93 = scmp.eq.s32.totalorder %s25, 1
      %p94 = por %p92, %p93
      %p95 = scmp.ne.s32.totalorder %s87, %s90
      %p96 = scmp.eq.s32.totalorder %s25, 0
      %p97 = por %p95, %p96
      %p98 = scmp.ne.s32.totalorder %s87, %s90
      %p99 = scmp.eq.s32.totalorder %s30, 1
      %p100 = por %p98, %p99
      %p101 = scmp.ne.s32.totalorder %s90, %s91
      %p102 = scmp.eq.s32.totalorder %s30, 0
      %p103 = por %p101, %p102
      %p104 = scmp.ne.s32.totalorder %s90, %s91
      %p105 = scmp.eq.s32.totalorder %s31, 1
      %p106 = por %p104, %p105
      %p108 = scmp.ne.s32.totalorder %s91, %s107
      %p109 = scmp.eq.s32.totalorder %s31, 0
      %p110 = por %p108, %p109
      %s112 = sadd.s32 %s111, 1
      %p115 = scmp.eq.s32.totalorder %s25, 1
      %p116 = scmp.ne.s32.totalorder %s111, %s113
      %p117 = scmp.eq.s32.totalorder %s25, 0
      %p118 = por %p116, %p117
      %p119 = scmp.ne.s32.totalorder %s111, %s113
      %p120 = scmp.eq.s32.totalorder %s30, 1
      %p121 = por %p119, %p120
      %p122 = scmp.ne.s32.totalorder %s113, %s114
      %p123 = scmp.eq.s32.totalorder %s30, 0
      %p124 = por %p122, %p123
      %p125 = scmp.ne.s32.totalorder %s113, %s114
      %p126 = scmp.eq.s32.totalorder %s31, 1
      %p127 = por %p125, %p126
      %p129 = scmp.ne.s32.totalorder %s114, %s128
      %p130 = scmp.eq.s32.totalorder %s31, 0
      %p131 = por %p129, %p130
      %s133 = sadd.s32 %s132, 1
      %p136 = scmp.eq.s32.totalorder %s25, 1
      %p137 = scmp.ne.s32.totalorder %s132, %s134
      %p138 = scmp.eq.s32.totalorder %s25, 0
      %p139 = por %p137, %p138
      %p140 = scmp.ne.s32.totalorder %s132, %s134
      %p141 = scmp.eq.s32.totalorder %s30, 1
      %p142 = por %p140, %p141
      %p143 = scmp.ne.s32.totalorder %s134, %s135
      %p144 = scmp.eq.s32.totalorder %s30, 0
      %p145 = por %p143, %p144
      %p146 = scmp.ne.s32.totalorder %s134, %s135
      %p147 = scmp.eq.s32.totalorder %s31, 1
      %p148 = por %p146, %p147
      %p150 = scmp.ne.s32.totalorder %s135, %s149
      %p151 = scmp.eq.s32.totalorder %s31, 0
      %p152 = por %p150, %p151
      %s154 = sadd.s32 %s153, 1
      %p157 = scmp.eq.s32.totalorder %s25, 1
      %p158 = scmp.ne.s32.totalorder %s153, %s155
      %p159 = scmp.eq.s32.totalorder %s25, 0
      %p160 = por %p158, %p159
      %p161 = scmp.ne.s32.totalorder %s153, %s155
      %p162 = scmp.eq.s32.totalorder %s30, 1
      %p163 = por %p161, %p162
      %p164 = scmp.ne.s32.totalorder %s155, %s156
      %p165 = scmp.eq.s32.totalorder %s30, 0
      %p166 = por %p164, %p165
      %p167 = scmp.ne.s32.totalorder %s155, %s156
      %p168 = scmp.eq.s32.totalorder %s31, 1
      %p169 = por %p167, %p168
      %p171 = scmp.ne.s32.totalorder %s156, %s170
      %p172 = scmp.eq.s32.totalorder %s31, 0
      %p173 = por %p171, %p172
      %s175 = sadd.s32 %s174, 1
      %p178 = scmp.eq.s32.totalorder %s25, 1
      %p179 = scmp.ne.s32.totalorder %s174, %s176
      %p180 = scmp.eq.s32.totalorder %s25, 0
      %p181 = por %p179, %p180
      %p182 = scmp.ne.s32.totalorder %s174, %s176
      %p183 = scmp.eq.s32.totalorder %s30, 1
      %p184 = por %p182, %p183
      %p185 = scmp.ne.s32.totalorder %s176, %s177
      %p186 = scmp.eq.s32.totalorder %s30, 0
      %p187 = por %p185, %p186
      %p188 = scmp.ne.s32.totalorder %s176, %s177
      %p189 = scmp.eq.s32.totalorder %s31, 1
      %p190 = por %p188, %p189
      %p192 = scmp.ne.s32.totalorder %s177, %s191
      %p193 = scmp.eq.s32.totalorder %s31, 0
      %p194 = por %p192, %p193
      %s196 = sadd.s32 %s195, 1
      %p199 = scmp.eq.s32.totalorder %s25, 1
      %p200 = scmp.ne.s32.totalorder %s195, %s197
      %p201 = scmp.eq.s32.totalorder %s25, 0
      %p202 = por %p200, %p201
      %p203 = scmp.ne.s32.totalorder %s195, %s197
      %p204 = scmp.eq.s32.totalorder %s30, 1
      %p205 = por %p203, %p204
      %p206 = scmp.ne.s32.totalorder %s197, %s198
      %p207 = scmp.eq.s32.totalorder %s30, 0
      %p208 = por %p206, %p207
      %p209 = scmp.ne.s32.totalorder %s197, %s198
      %p210 = scmp.eq.s32.totalorder %s31, 1
      %p211 = por %p209, %p210
      %p213 = scmp.ne.s32.totalorder %s198, %s212
      %p214 = scmp.eq.s32.totalorder %s31, 0
      %p215 = por %p213, %p214
      %s217 = sadd.s32 %s216, 1
      %p220 = scmp.eq.s32.totalorder %s25, 1
      %p221 = scmp.ne.s32.totalorder %s216, %s218
      %p222 = scmp.eq.s32.totalorder %s25, 0
      %p223 = por %p221, %p222
      %p224 = scmp.ne.s32.totalorder %s216, %s218
      %p225 = scmp.eq.s32.totalorder %s30, 1
      %p226 = por %p224, %p225
      %p227 = scmp.ne.s32.totalorder %s218, %s219
      %p228 = scmp.eq.s32.totalorder %s30, 0
      %p229 = por %p227, %p228
      %p230 = scmp.ne.s32.totalorder %s218, %s219
      %p231 = scmp.eq.s32.totalorder %s31, 1
      %p232 = por %p230, %p231
      %p234 = scmp.ne.s32.totalorder %s219, %s233
      %p235 = scmp.eq.s32.totalorder %s31, 0
      %p236 = por %p234, %p235
      %s238 = sadd.s32 %s237, 1
      %p241 = scmp.eq.s32.totalorder %s25, 1
      %p242 = scmp.ne.s32.totalorder %s237, %s239
      %p243 = scmp.eq.s32.totalorder %s25, 0
      %p244 = por %p242, %p243
      %p245 = scmp.ne.s32.totalorder %s237, %s239
      %p246 = scmp.eq.s32.totalorder %s30, 1
      %p247 = por %p245, %p246
      %p248 = scmp.ne.s32.totalorder %s239, %s240
      %p249 = scmp.eq.s32.totalorder %s30, 0
      %p250 = por %p248, %p249
      %p251 = scmp.ne.s32.totalorder %s239, %s240
      %p252 = scmp.eq.s32.totalorder %s31, 1
      %p253 = por %p251, %p252
      %p255 = scmp.ne.s32.totalorder %s240, %s254
      %p256 = scmp.eq.s32.totalorder %s31, 0
      %p257 = por %p255, %p256
      %s258 = ssub.s32 %s25, %s32
      %p259 = scmp.eq.s32.totalorder %s258, 0
      %s261 = sadd.s32 %s260, 1
      %s262 = scalar_select %p259, %s260, %s261
      %p265 = pneg %p259
      %p266 = scmp.eq.s32.totalorder %s25, 1
      %p267 = por %p265, %p266
      %p268 = scmp.ne.s32.totalorder %s260, %s263
      %p269 = scmp.eq.s32.totalorder %s25, 0
      %p270 = por %p268, %p269
      %p271 = scmp.ne.s32.totalorder %s260, %s263
      %p272 = scmp.eq.s32.totalorder %s30, 1
      %p273 = por %p271, %p272
      %p274 = scmp.ne.s32.totalorder %s263, %s264
      %p275 = scmp.eq.s32.totalorder %s30, 0
      %p276 = por %p274, %p275
      %p277 = scmp.ne.s32.totalorder %s263, %s264
      %p278 = scmp.eq.s32.totalorder %s31, 1
      %p279 = por %p277, %p278
      %p281 = scmp.ne.s32.totalorder %s264, %s280
      %p282 = scmp.eq.s32.totalorder %s31, 0
      %p283 = por %p281, %p282
      %p284 = scmp.le.s32.totalorder 1, %s25
      %p285 = scmp.lt.s32.totalorder %s25, 3
      %p286 = pnand %p284, %p285
      %p287 = pneg %p286
      // Predicated region
      $region9: #{tpu_custom_call.1} parent=5 // pred_check
        _
      $region10: #{tpu_custom_call.1} parent=5 // pred_check_branch
        %289 = sbr.rel (%p286) target = $region12
      $region11: #{tpu_custom_call.1} parent=5 // pred_region
        %s290 = ssub.s32 %s25, 1
        // Predicated region
        $region13: #{tpu_custom_call.1} parent=11 // pred_check
          %p291 = pneg %p124
        $region14: #{tpu_custom_call.1} parent=11 // pred_check_branch
          %293 = sbr.rel (%p291) target = $region16
        $region15: #{tpu_custom_call.1} parent=11 // pred_region
          %s295 = ssub.s32 2048, 2048
          %296 = vsyncadd [#allocation6], %s295
          %s297 = sshll.u32 [#allocation5], 4
          %s298 = int_to_ptr.vmem [resolvable:$true] %s297
          %303 = dma.hbm_to_vmem [thread:$0]  %s3, 2048, %s298, [#allocation6], 256, 256, 16
        $region16: #{tpu_custom_call.1} parent=11 // pred_fallthru
          _
        // Predicated region
        $region17: #{tpu_custom_call.1} parent=11 // pred_check
          %p304 = pneg %p145
        $region18: #{tpu_custom_call.1} parent=11 // pred_check_branch
          %306 = sbr.rel (%p304) target = $region20
        $region19: #{tpu_custom_call.1} parent=11 // pred_region
          %s308 = ssub.s32 512, 512
          %309 = vsyncadd [#allocation6], %s308
          %s310 = sshll.u32 [#allocation7], 4
          %s311 = int_to_ptr.vmem [resolvable:$true] %s310
          %316 = dma.hbm_to_vmem [thread:$0]  %s4, 512, %s311, [#allocation6], 256, 256, 16
        $region20: #{tpu_custom_call.1} parent=11 // pred_fallthru
          _
        // Predicated region
        $region21: #{tpu_custom_call.1} parent=11 // pred_check
          %p317 = pneg %p166
        $region22: #{tpu_custom_call.1} parent=11 // pred_check_branch
          %319 = sbr.rel (%p317) target = $region24
        $region23: #{tpu_custom_call.1} parent=11 // pred_region
          _
        $region24: #{tpu_custom_call.1} parent=11 // pred_fallthru
          _
        // Predicated region
        $region25: #{tpu_custom_call.1} parent=11 // pred_check
          %p320 = pneg %p187
        $region26: #{tpu_custom_call.1} parent=11 // pred_check_branch
          %322 = sbr.rel (%p320) target = $region28
        $region27: #{tpu_custom_call.1} parent=11 // pred_region
          %s324 = ssub.s32 128, 128
          %325 = vsyncadd [#allocation9], %s324
          %s327 = sshll.u32 [#allocation8], 4
          %s328 = int_to_ptr.vmem [resolvable:$true] %s327
          %330 = dma.hbm_to_vmem [thread:$0]  %s6, 128, %s328, [#allocation9]
        $region28: #{tpu_custom_call.1} parent=11 // pred_fallthru
          _
        // Predicated region
        $region29: #{tpu_custom_call.1} parent=11 // pred_check
          %p331 = pneg %p208
        $region30: #{tpu_custom_call.1} parent=11 // pred_check_branch
          %333 = sbr.rel (%p331) target = $region32
        $region31: #{tpu_custom_call.1} parent=11 // pred_region
          %s335 = ssub.s32 64, 64
          %336 = vsyncadd [#allocation9], %s335
          %s338 = sshll.u32 [#allocation10], 4
          %s339 = int_to_ptr.vmem [resolvable:$true] %s338
          %341 = dma.hbm_to_vmem [thread:$0]  %s7, 64, %s339, [#allocation9]
        $region32: #{tpu_custom_call.1} parent=11 // pred_fallthru
          _
        // Predicated region
        $region33: #{tpu_custom_call.1} parent=11 // pred_check
          %p342 = pneg %p229
        $region34: #{tpu_custom_call.1} parent=11 // pred_check_branch
          %344 = sbr.rel (%p342) target = $region36
        $region35: #{tpu_custom_call.1} parent=11 // pred_region
          %s346 = ssub.s32 64, 64
          %347 = vsyncadd [#allocation12], %s346
          %s349 = sshll.u32 [#allocation11], 4
          %s350 = int_to_ptr.vmem [resolvable:$true] %s349
          %352 = dma.hbm_to_vmem [thread:$0]  %s8, 64, %s350, [#allocation12]
        $region36: #{tpu_custom_call.1} parent=11 // pred_fallthru
          _
        // Predicated region
        $region37: #{tpu_custom_call.1} parent=11 // pred_check
          %p353 = pneg %p250
        $region38: #{tpu_custom_call.1} parent=11 // pred_check_branch
          %355 = sbr.rel (%p353) target = $region40
        $region39: #{tpu_custom_call.1} parent=11 // pred_region
          _
        $region40: #{tpu_custom_call.1} parent=11 // pred_fallthru
          _
      $region12: #{tpu_custom_call.1} parent=5 // pred_fallthru
        _
      %p356 = scmp.lt.s32.totalorder %s25, 2
      // Predicated region
      $region41: #{tpu_custom_call.1} parent=5 // pred_check
        %p357 = pneg %p356
      $region42: #{tpu_custom_call.1} parent=5 // pred_check_branch
        %359 = sbr.rel (%p357) target = $region44
      $region43: #{tpu_custom_call.1} parent=5 // pred_region
        // Predicated region
        $region45: #{tpu_custom_call.1} parent=43 // pred_check
          %p360 = pneg %p45
        $region46: #{tpu_custom_call.1} parent=43 // pred_check_branch
          %362 = sbr.rel (%p360) target = $region48
        $region47: #{tpu_custom_call.1} parent=43 // pred_region
          %p363 = scmp.lt.s32.totalorder %s25, 1
          %s364 = scalar_select %p363, %s25, 1
          %s365 = smul.addr %s364, 4
          %s366 = scalar_lea.vmem %s0, %s365
        $region48: #{tpu_custom_call.1} parent=43 // pred_fallthru
          _
        // Predicated region
        $region49: #{tpu_custom_call.1} parent=43 // pred_check
          %p367 = pneg %p71
        $region50: #{tpu_custom_call.1} parent=43 // pred_check_branch
          %369 = sbr.rel (%p367) target = $region52
        $region51: #{tpu_custom_call.1} parent=43 // pred_region
          %s370 = sand.u32 %s61, 1
          %s371 = scalar_lea.sflag [#allocation3], %s370
          %s372 = sand.u32 %s61, 1
          %s373 = smul.addr %s372, 8
          %s374 = scalar_lea.vmem [#allocation2], %s373
          %s376 = ssub.s32 128, 128
          %377 = vsyncadd %s371, %s376
          %s378 = smul.addr %s25, 2
          %s379 = smul.addr %s378, 64
          %s380 = scalar_lea.hbm %s1, %s379
          %s382 = sshll.u32 %s374, 4
          %s383 = int_to_ptr.vmem [resolvable:$true] %s382
          %385 = dma.hbm_to_vmem [thread:$0]  %s380, 128, %s383, %s371
        $region52: #{tpu_custom_call.1} parent=43 // pred_fallthru
          _
        // Predicated region
        $region53: #{tpu_custom_call.1} parent=43 // pred_check
          %p386 = pneg %p97
        $region54: #{tpu_custom_call.1} parent=43 // pred_check_branch
          %388 = sbr.rel (%p386) target = $region56
        $region55: #{tpu_custom_call.1} parent=43 // pred_region
          %p389 = scmp.lt.s32.totalorder %s25, 1
          %s390 = scalar_select %p389, %s25, 1
          %s391 = smul.addr %s390, 4
          %s392 = scalar_lea.vmem %s2, %s391
        $region56: #{tpu_custom_call.1} parent=43 // pred_fallthru
          _
      $region44: #{tpu_custom_call.1} parent=5 // pred_fallthru
        _
      %p393 = scmp.le.s32.totalorder 1, %s25
      %p394 = scmp.lt.s32.totalorder %s25, 3
      %p395 = pnand %p393, %p394
      %p396 = pneg %p395
      // Predicated region
      $region57: #{tpu_custom_call.1} parent=5 // pred_check
        _
      $region58: #{tpu_custom_call.1} parent=5 // pred_check_branch
        %398 = sbr.rel (%p395) target = $region60
      $region59: #{tpu_custom_call.1} parent=5 // pred_region
        %s399 = ssub.s32 %s25, 1
        %s400 = sand.u32 %s64, 1
        %s401 = scalar_lea.sflag [#allocation3], %s400
        %s402 = sand.u32 %s64, 1
        %s403 = smul.addr %s402, 8
        %s404 = scalar_lea.vmem [#allocation2], %s403
        // Predicated region
        $region61: #{tpu_custom_call.1} parent=59 // pred_check
          %p405 = pneg %p77
        $region62: #{tpu_custom_call.1} parent=59 // pred_check_branch
          %407 = sbr.rel (%p405) target = $region64
        $region63: #{tpu_custom_call.1} parent=59 // pred_region
          %408 = dma.done %s401, 128
        $region64: #{tpu_custom_call.1} parent=59 // pred_fallthru
          _
        // Predicated region
        $region65: #{tpu_custom_call.1} parent=59 // pred_check
          %p409 = pneg %p124
        $region66: #{tpu_custom_call.1} parent=59 // pred_check_branch
          %411 = sbr.rel (%p409) target = $region68
        $region67: #{tpu_custom_call.1} parent=59 // pred_region
          %412 = dma.done [#allocation6], 2048
        $region68: #{tpu_custom_call.1} parent=59 // pred_fallthru
          _
        // Predicated region
        $region69: #{tpu_custom_call.1} parent=59 // pred_check
          %p413 = pneg %p145
        $region70: #{tpu_custom_call.1} parent=59 // pred_check_branch
          %415 = sbr.rel (%p413) target = $region72
        $region71: #{tpu_custom_call.1} parent=59 // pred_region
          %416 = dma.done [#allocation6], 512
        $region72: #{tpu_custom_call.1} parent=59 // pred_fallthru
          _
        // Predicated region
        $region73: #{tpu_custom_call.1} parent=59 // pred_check
          %p417 = pneg %p187
        $region74: #{tpu_custom_call.1} parent=59 // pred_check_branch
          %419 = sbr.rel (%p417) target = $region76
        $region75: #{tpu_custom_call.1} parent=59 // pred_region
          %420 = dma.done [#allocation9], 128
        $region76: #{tpu_custom_call.1} parent=59 // pred_fallthru
          _
        // Predicated region
        $region77: #{tpu_custom_call.1} parent=59 // pred_check
          %p421 = pneg %p208
        $region78: #{tpu_custom_call.1} parent=59 // pred_check_branch
          %423 = sbr.rel (%p421) target = $region80
        $region79: #{tpu_custom_call.1} parent=59 // pred_region
          %424 = dma.done [#allocation9], 64
        $region80: #{tpu_custom_call.1} parent=59 // pred_fallthru
          _
        // Predicated region
        $region81: #{tpu_custom_call.1} parent=59 // pred_check
          %p425 = pneg %p229
        $region82: #{tpu_custom_call.1} parent=59 // pred_check_branch
          %427 = sbr.rel (%p425) target = $region84
        $region83: #{tpu_custom_call.1} parent=59 // pred_region
          %428 = dma.done [#allocation12], 64
        $region84: #{tpu_custom_call.1} parent=59 // pred_fallthru
          _
        %p429 = scmp.lt.s32.totalorder %s30, 1
        %s430 = scalar_select %p429, %s30, 1
        %s431 = smul.addr %s430, 4
        %s432 = scalar_lea.vmem %s0, %s431
        %p433 = pneg %p51
        %p434 = pneg %p48
        %s435 = sand.u32 %s64, 1
        %s436 = scalar_lea.sflag [#allocation3], %s435
        %s437 = sand.u32 %s64, 1
        %s438 = smul.addr %s437, 8
        %s439 = scalar_lea.vmem [#allocation2], %s438
        %p440 = pneg %p77
        %p441 = pneg %p74
        %p442 = scmp.lt.s32.totalorder %s30, 1
        %s443 = scalar_select %p442, %s30, 1
        %s444 = smul.addr %s443, 4
        %s445 = scalar_lea.vmem %s2, %s444
        %p446 = pneg %p103
        %p447 = pneg %p100
        %p448 = pneg %p124
        %p449 = pneg %p121
        %p450 = pneg %p145
        %p451 = pneg %p142
        %p452 = pneg %p166
        %p453 = pneg %p163
        %p454 = pneg %p187
        %p455 = pneg %p184
        %p456 = pneg %p208
        %p457 = pneg %p205
        %p458 = pneg %p229
        %p459 = pneg %p226
        %p460 = pneg %p250
        %p461 = pneg %p247
        %p462 = pneg %p276
        %p463 = pneg %p273
        %s464 = sand.u32 %s263, 1
        %s465 = scalar_lea.sflag [#allocation4], %s464
        %s466 = sand.u32 %s263, 1
        %s467 = smul.addr %s466, 8
        %s468 = scalar_lea.vmem [#allocation13], %s467
        %p469 = scmp.lt.s32.totalorder %s30, 1
        %s470 = scalar_select %p469, %s30, 1
        %s471 = smul.addr %s470, 4
        %s472 = scalar_lea.vmem %s0, %s471
        %p473 = scmp.lt.s32.totalorder %s30, 1
        %s474 = scalar_select %p473, %s30, 1
        %s475 = smul.addr %s474, 4
        %s476 = scalar_lea.vmem %s2, %s475
        %v477 = vld [vmem:[#allocation7] sm:$0xff]
        %v478 = vld [vmem:[#allocation7 + $0x8] sm:$0xff]
        %v479 = vld [vmem:[#allocation7 + $0x10] sm:$0x1]
        %v480 = vld [vmem:[#allocation7 + $0x18] sm:$0x1]
        %v481 = vld [vmem:[%s472] sm:$0xf]
        %v482 = vld [vmem:[#allocation5] sm:$0xff]
        %v483 = vld [vmem:[#allocation5 + $0x8] sm:$0xff]
        %v484 = vld [vmem:[#allocation5 + $0x10] sm:$0xff]
        %v485 = vld [vmem:[#allocation5 + $0x18] sm:$0xff]
        %v486 = vld [vmem:[#allocation5 + $0x20] sm:$0xff]
        %v487 = vld [vmem:[#allocation5 + $0x28] sm:$0xff]
        %v488 = vld [vmem:[#allocation5 + $0x30] sm:$0xff]
        %v489 = vld [vmem:[#allocation5 + $0x38] sm:$0xff]
        %v490 = vld [vmem:[#allocation5 + $0x40] sm:$0xff]
        %v491 = vld [vmem:[#allocation5 + $0x48] sm:$0xff]
        %v492 = vld [vmem:[#allocation5 + $0x50] sm:$0xff]
        %v493 = vld [vmem:[#allocation5 + $0x58] sm:$0xff]
        %v494 = vld [vmem:[#allocation5 + $0x60] sm:$0xff]
        %v495 = vld [vmem:[#allocation5 + $0x68] sm:$0xff]
        %v496 = vld [vmem:[#allocation5 + $0x70] sm:$0xff]
        %v497 = vld [vmem:[#allocation5 + $0x78] sm:$0xff]
        %vm498 = vcmask 523264
        %v500 = vsel %vm498, %v481, 0
        %502 = vmatprep.subr.mxu0 0.0
        %503 = vmatpush1.msra.mxu0 0.0
        %504 = vmatprep.subr.mxu0 0.0
        %505 = vmatpush1.msra.mxu0 0.0
        %506 = vmatprep.subr.mxu0 0.0
        %507 = vmatpush1.msra.mxu0 0.0
        %508 = vmatprep.subr.mxu0 0.0
        %509 = vmatpush1.msra.mxu0 0.0
        %510 = vmatprep.subr.mxu0 0.0
        %511 = vmatpush1.msra.mxu0 0.0
        %512 = vmatprep.subr.mxu0 0.0
        %513 = vmatpush1.msra.mxu0 0.0
        %514 = vmatprep.subr.mxu0 0.0
        %515 = vmatpush1.msra.mxu0 0.0
        %516 = vmatprep.subr.mxu0 0.0
        %517 = vmatpush1.msra.mxu0 0.0
        %518 = vmatprep.subr.mxu0 %v497
        %519 = vmatpush1.msra.mxu0 %v496
        %520 = vmatprep.subr.mxu0 %v495
        %521 = vmatpush1.msra.mxu0 %v494
        %522 = vmatprep.subr.mxu0 %v493
        %523 = vmatpush1.msra.mxu0 %v492
        %524 = vmatprep.subr.mxu0 %v491
        %525 = vmatpush1.msra.mxu0 %v490
        %526 = vmatprep.subr.mxu0 %v489
        %527 = vmatpush1.msra.mxu0 %v488
        %528 = vmatprep.subr.mxu0 %v487
        %529 = vmatpush1.msra.mxu0 %v486
        %530 = vmatprep.subr.mxu0 %v485
        %531 = vmatpush1.msra.mxu0 %v484
        %532 = vmatprep.subr.mxu0 %v483
        %533 = vmatpush1.msra.mxu0 %v482
        %534 = vmatprep.subr.mxu0 0.0
        %535 = vmatpush2.msra.mxu0 0.0
        %536 = vmatprep.subr.mxu0 0.0
        %537 = vmatpush2.msra.mxu0 0.0
        %538 = vmatprep.subr.mxu0 0.0
        %539 = vmatpush2.msra.mxu0 0.0
        %540 = vmatprep.subr.mxu0 0.0
        %541 = vmatpush2.msra.mxu0 0.0
        %542 = vmatprep.subr.mxu0 0.0
        %543 = vmatpush2.msra.mxu0 0.0
        %544 = vmatprep.subr.mxu0 0.0
        %545 = vmatpush2.msra.mxu0 0.0
        %546 = vmatprep.subr.mxu0 0.0
        %547 = vmatpush2.msra.mxu0 0.0
        %548 = vmatprep.subr.mxu0 0.0
        %549 = vmatpush2.msra.mxu0 0.0
        %550 = vmatprep.subr.mxu0 0.0
        %551 = vmatpush2.msra.mxu0 0.0
        %552 = vmatprep.subr.mxu0 0.0
        %553 = vmatpush2.msra.mxu0 0.0
        %554 = vmatprep.subr.mxu0 0.0
        %555 = vmatpush2.msra.mxu0 0.0
        %556 = vmatprep.subr.mxu0 0.0
        %557 = vmatpush2.msra.mxu0 0.0
        %558 = vmatprep.subr.mxu0 0.0
        %559 = vmatpush2.msra.mxu0 0.0
        %560 = vmatprep.subr.mxu0 0.0
        %561 = vmatpush2.msra.mxu0 0.0
        %562 = vmatprep.subr.mxu0 0.0
        %563 = vmatpush2.msra.mxu0 0.0
        %564 = vmatprep.subr.mxu0 0.0
        %565 = vmatpush2.msra.mxu0 0.0
        %566 = vmatprep.mubr.f32.mxu0 0.0
        %567 = vmatmul.mubr.f32.gmra.mxu0 %v500
        %v568 = vpop.f32.mrf.mxu0
        %v569 = vadd.f32 0.0, %v568
        %v570 = vpop.f32.mrf.mxu0
        %v571 = vadd.f32 0.0, %v570
        %572 = vdwg.mxu0
        %v573 = vld [vmem:[%s404] sm:$0xff]
        %v575 = vcombine.high %v573, %v573
        %v579 = vrot.slane %v569, 4
        %v580 = vrot.slane %v571, 4
        %vm583 = vcmask 1043456
        %v584 = vsel %vm583, %v573, %v579
        %v585 = vsel %vm583, %v575, %v580
        %v586 = vld [vmem:[%s9] sm:$0xff]
        %v587 = vld [vmem:[%s5] sm:$0xff]
        %588 = vrot.lane.b32.xlu0 %v584, 17
        %v589 = vpop.permute.xlu0 %588
        %590 = vrot.lane.b32.xlu0 %v585, 17
        %v591 = vpop.permute.xlu0 %590
        %v592 = vlaneseq
        %v593 = vand.u32 %v592, 127
        %vm594 = vcmp.lt.s32.totalorder %v593, 17
        %v595 = vsel %vm594, %v589, %v591
        %v596 = vsel %vm594, %v591, %v589
        %v597 = vlaneseq
        %v598 = vshrl.u32 %v597, 7
        %v599 = vsub.s32 0, %v598
        %v600 = vrot.slane %v477, %v599
        %v601 = vlaneseq
        %v602 = vshrl.u32 %v601, 7
        %v603 = vsub.s32 0, %v602
        %v604 = vrot.slane %v478, %v603
        %v605 = vmul.f32 %v596, %v600
        %v606 = vmul.f32 %v595, %v604
        %607 = vrot.lane.b32.xlu0 %v584, 16
        %v608 = vpop.permute.xlu0 %607
        %609 = vrot.lane.b32.xlu0 %v585, 16
        %v610 = vpop.permute.xlu0 %609
        %vm611 = vcmp.lt.s32.totalorder %v593, 16
        %v612 = vsel %vm611, %v608, %v610
        %v613 = vsel %vm611, %v610, %v608
        %v614 = vlaneseq
        %v615 = vshrl.u32 %v614, 7
        %v616 = vsub.s32 1, %v615
        %v617 = vrot.slane %v477, %v616
        %v618 = vlaneseq
        %v619 = vshrl.u32 %v618, 7
        %v620 = vsub.s32 1, %v619
        %v621 = vrot.slane %v478, %v620
        %v622 = vmul.f32 %v613, %v617
        %v623 = vmul.f32 %v612, %v621
        %624 = vrot.lane.b32.xlu0 %v584, 15
        %v625 = vpop.permute.xlu0 %624
        %626 = vrot.lane.b32.xlu0 %v585, 15
        %v627 = vpop.permute.xlu0 %626
        %vm628 = vcmp.lt.s32.totalorder %v593, 15
        %v629 = vsel %vm628, %v625, %v627
        %v630 = vsel %vm628, %v627, %v625
        %v631 = vlaneseq
        %v632 = vshrl.u32 %v631, 7
        %v633 = vsub.s32 2, %v632
        %v634 = vrot.slane %v477, %v633
        %v635 = vlaneseq
        %v636 = vshrl.u32 %v635, 7
        %v637 = vsub.s32 2, %v636
        %v638 = vrot.slane %v478, %v637
        %v639 = vmul.f32 %v630, %v634
        %v640 = vmul.f32 %v629, %v638
        %641 = vrot.lane.b32.xlu0 %v584, 1
        %v642 = vpop.permute.xlu0 %641
        %643 = vrot.lane.b32.xlu0 %v585, 1
        %v644 = vpop.permute.xlu0 %643
        %vm645 = vcmp.lt.s32.totalorder %v593, 1
        %v646 = vsel %vm645, %v642, %v644
        %v647 = vsel %vm645, %v644, %v642
        %v648 = vlaneseq
        %v649 = vshrl.u32 %v648, 7
        %v650 = vsub.s32 3, %v649
        %v651 = vrot.slane %v477, %v650
        %v652 = vlaneseq
        %v653 = vshrl.u32 %v652, 7
        %v654 = vsub.s32 3, %v653
        %v655 = vrot.slane %v478, %v654
        %v656 = vmul.f32 %v647, %v651
        %v657 = vmul.f32 %v646, %v655
        %658 = vrot.lane.b32.xlu0 %v584, 127
        %v659 = vpop.permute.xlu0 %658
        %660 = vrot.lane.b32.xlu0 %v585, 127
        %v661 = vpop.permute.xlu0 %660
        %vm662 = vcmp.lt.s32.totalorder %v593, 127
        %v663 = vsel %vm662, %v659, %v661
        %v664 = vsel %vm662, %v661, %v659
        %v665 = vlaneseq
        %v666 = vshrl.u32 %v665, 7
        %v667 = vsub.s32 5, %v666
        %v668 = vrot.slane %v477, %v667
        %v669 = vlaneseq
        %v670 = vshrl.u32 %v669, 7
        %v671 = vsub.s32 5, %v670
        %v672 = vrot.slane %v478, %v671
        %v673 = vmul.f32 %v663, %v668
        %v674 = vmul.f32 %v664, %v672
        %675 = vrot.lane.b32.xlu0 %v584, 113
        %v676 = vpop.permute.xlu0 %675
        %677 = vrot.lane.b32.xlu0 %v585, 113
        %v678 = vpop.permute.xlu0 %677
        %vm679 = vcmp.lt.s32.totalorder %v593, 113
        %v680 = vsel %vm679, %v676, %v678
        %v681 = vsel %vm679, %v678, %v676
        %v682 = vlaneseq
        %v683 = vshrl.u32 %v682, 7
        %v684 = vsub.s32 6, %v683
        %v685 = vrot.slane %v477, %v684
        %v686 = vlaneseq
        %v687 = vshrl.u32 %v686, 7
        %v688 = vsub.s32 6, %v687
        %v689 = vrot.slane %v478, %v688
        %v690 = vmul.f32 %v680, %v685
        %v691 = vmul.f32 %v681, %v689
        %692 = vrot.lane.b32.xlu0 %v584, 112
        %v693 = vpop.permute.xlu0 %692
        %694 = vrot.lane.b32.xlu0 %v585, 112
        %v695 = vpop.permute.xlu0 %694
        %vm696 = vcmp.lt.s32.totalorder %v593, 112
        %v697 = vsel %vm696, %v693, %v695
        %v698 = vsel %vm696, %v695, %v693
        %v699 = vlaneseq
        %v700 = vshrl.u32 %v699, 7
        %v701 = vsub.s32 7, %v700
        %v702 = vrot.slane %v477, %v701
        %v703 = vlaneseq
        %v704 = vshrl.u32 %v703, 7
        %v705 = vsub.s32 7, %v704
        %v706 = vrot.slane %v478, %v705
        %v707 = vmul.f32 %v697, %v702
        %v708 = vmul.f32 %v698, %v706
        %709 = vrot.lane.b32.xlu0 %v584, 111
        %v710 = vpop.permute.xlu0 %709
        %711 = vrot.lane.b32.xlu0 %v585, 111
        %v712 = vpop.permute.xlu0 %711
        %vm713 = vcmp.lt.s32.totalorder %v593, 111
        %v714 = vsel %vm713, %v710, %v712
        %v715 = vsel %vm713, %v712, %v710
        %v716 = vlaneseq
        %v717 = vshrl.u32 %v716, 7
        %v718 = vsub.s32 0, %v717
        %v719 = vrot.slane %v479, %v718
        %v720 = vlaneseq
        %v721 = vshrl.u32 %v720, 7
        %v722 = vsub.s32 0, %v721
        %v723 = vrot.slane %v480, %v722
        %v724 = vmul.f32 %v714, %v719
        %v725 = vmul.f32 %v715, %v723
        %vm726 = vcmask 588800
        %v728 = vsel %vm726, %v587, 0
        %730 = vmatprep.subr.mxu0 0.0
        %731 = vmatpush1.msra.mxu0 0.0
        %732 = vmatprep.subr.mxu0 0.0
        %733 = vmatpush1.msra.mxu0 0.0
        %734 = vmatprep.subr.mxu0 0.0
        %735 = vmatpush1.msra.mxu0 0.0
        %736 = vmatprep.subr.mxu0 0.0
        %737 = vmatpush1.msra.mxu0 0.0
        %738 = vmatprep.subr.mxu0 0.0
        %739 = vmatpush1.msra.mxu0 0.0
        %740 = vmatprep.subr.mxu0 0.0
        %741 = vmatpush1.msra.mxu0 0.0
        %742 = vmatprep.subr.mxu0 0.0
        %743 = vmatpush1.msra.mxu0 0.0
        %744 = vmatprep.subr.mxu0 %v725
        %745 = vmatpush1.msra.mxu0 %v724
        %746 = vmatprep.subr.mxu0 %v708
        %747 = vmatpush1.msra.mxu0 %v707
        %748 = vmatprep.subr.mxu0 %v691
        %749 = vmatpush1.msra.mxu0 %v690
        %750 = vmatprep.subr.mxu0 %v674
        %751 = vmatpush1.msra.mxu0 %v673
        %752 = vmatprep.subr.mxu0 %v585
        %753 = vmatpush1.msra.mxu0 %v584
        %754 = vmatprep.subr.mxu0 %v657
        %755 = vmatpush1.msra.mxu0 %v656
        %756 = vmatprep.subr.mxu0 %v640
        %757 = vmatpush1.msra.mxu0 %v639
        %758 = vmatprep.subr.mxu0 %v623
        %759 = vmatpush1.msra.mxu0 %v622
        %760 = vmatprep.subr.mxu0 %v606
        %761 = vmatpush1.msra.mxu0 %v605
        %762 = vmatprep.subr.mxu0 0.0
        %763 = vmatpush2.msra.mxu0 0.0
        %764 = vmatprep.subr.mxu0 0.0
        %765 = vmatpush2.msra.mxu0 0.0
        %766 = vmatprep.subr.mxu0 0.0
        %767 = vmatpush2.msra.mxu0 0.0
        %768 = vmatprep.subr.mxu0 0.0
        %769 = vmatpush2.msra.mxu0 0.0
        %770 = vmatprep.subr.mxu0 0.0
        %771 = vmatpush2.msra.mxu0 0.0
        %772 = vmatprep.subr.mxu0 0.0
        %773 = vmatpush2.msra.mxu0 0.0
        %774 = vmatprep.subr.mxu0 0.0
        %775 = vmatpush2.msra.mxu0 0.0
        %776 = vmatprep.subr.mxu0 0.0
        %777 = vmatpush2.msra.mxu0 0.0
        %778 = vmatprep.subr.mxu0 0.0
        %779 = vmatpush2.msra.mxu0 0.0
        %780 = vmatprep.subr.mxu0 0.0
        %781 = vmatpush2.msra.mxu0 0.0
        %782 = vmatprep.subr.mxu0 0.0
        %783 = vmatpush2.msra.mxu0 0.0
        %784 = vmatprep.subr.mxu0 0.0
        %785 = vmatpush2.msra.mxu0 0.0
        %786 = vmatprep.subr.mxu0 0.0
        %787 = vmatpush2.msra.mxu0 0.0
        %788 = vmatprep.subr.mxu0 0.0
        %789 = vmatpush2.msra.mxu0 0.0
        %790 = vmatprep.subr.mxu0 0.0
        %791 = vmatpush2.msra.mxu0 0.0
        %792 = vmatprep.subr.mxu0 0.0
        %793 = vmatpush2.msra.mxu0 0.0
        %794 = vmatprep.mubr.f32.mxu0 0.0
        %795 = vmatmul.mubr.f32.gmra.mxu0 %v728
        %v796 = vpop.f32.mrf.mxu0
        %v797 = vadd.f32 0.0, %v796
        %v798 = vpop.f32.mrf.mxu0
        %v799 = vadd.f32 0.0, %v798
        %800 = vdwg.mxu0
        %v801 = vadd.f32 %v797, %v799
        %802 = vadd.xlane.f32.xlu0 %v801
        %v803 = vpop.xlane.xlu0 %802
        %v804 = vrot.slane %v803, 4
        %v805 = vadd.f32 %v803, %v804
        %v806 = vrot.slane %v805, 2
        %v807 = vadd.f32 %v805, %v806
        %v808 = vrot.slane %v807, 1
        %v809 = vadd.f32 %v807, %v808
        %v810 = vmul.f32 %v809, 0.00048828125
        %v811 = vsub.f32 %v797, %v810
        %v812 = vsub.f32 %v799, %v810
        %v813 = vmul.f32 %v811, %v811
        %v814 = vmul.f32 %v812, %v812
        %v815 = vadd.f32 %v813, %v814
        %816 = vadd.xlane.f32.xlu0 %v815
        %v817 = vpop.xlane.xlu0 %816
        %v818 = vrot.slane %v817, 4
        %v819 = vadd.f32 %v817, %v818
        %v820 = vrot.slane %v819, 2
        %v821 = vadd.f32 %v819, %v820
        %v822 = vrot.slane %v821, 1
        %v823 = vadd.f32 %v821, %v822
        %v824 = vmul.f32 %v823, 0.00048828125
        %v825 = vadd.f32 %v824, 1e-05
        %v826 = vrsqrt.pop %v825
        %v827 = vmul.f32 %v811, %v826
        %v828 = vmul.f32 %v812, %v826
        %830 = vset.pattern.permute.xlu0 0
        %831 = vperm.xlu0 %830, %v586
        %v832 = vpop.permute.xlu0 %831
        %v834 = vmul.f32 %v827, %v832
        %v835 = vmul.f32 %v828, %v832
        %836 = vset.pattern.permute.xlu0 1
        %837 = vperm.xlu0 %836, %v586
        %v838 = vpop.permute.xlu0 %837
        %v840 = vadd.f32 %v834, %v838
        %v841 = vadd.f32 %v835, %v838
        %v842 = vmul.f32 %v840, 0.5
        %v843 = vmul.f32 %v841, 0.5
        %v844 = vmul.f32 %v840, 0.70710677
        %v845 = vmul.f32 %v841, 0.70710677
        %v846 = vmax.f32 %v844, -4.0
        %v847 = vmax.f32 %v845, -4.0
        %v848 = vmin.f32 %v846, 4.0
        %v849 = vmin.f32 %v847, 4.0
        %v850 = vmul.f32 %v848, %v848
        %v851 = vmul.f32 %v849, %v849
        %v852 = vmul.f32 %v850, -2.7261424e-10
        %v853 = vmul.f32 %v851, -2.7261424e-10
        %v854 = vadd.f32 %v852, 2.7706815e-08
        %v855 = vadd.f32 %v853, 2.7706815e-08
        %v856 = vmul.f32 %v850, %v854
        %v857 = vmul.f32 %v851, %v855
        %v858 = vadd.f32 %v856, -2.101024e-06
        %v859 = vadd.f32 %v857, -2.101024e-06
        %v860 = vmul.f32 %v850, %v858
        %v861 = vmul.f32 %v851, %v859
        %v862 = vadd.f32 %v860, -5.6925062e-05
        %v863 = vadd.f32 %v861, -5.6925062e-05
        %v864 = vmul.f32 %v850, %v862
        %v865 = vmul.f32 %v851, %v863
        %v866 = vadd.f32 %v864, -0.00073499064
        %v867 = vadd.f32 %v865, -0.00073499064
        %v868 = vmul.f32 %v850, %v866
        %v869 = vmul.f32 %v851, %v867
        %v870 = vadd.f32 %v868, -0.0029546
        %v871 = vadd.f32 %v869, -0.0029546
        %v872 = vmul.f32 %v850, %v870
        %v873 = vmul.f32 %v851, %v871
        %v874 = vadd.f32 %v872, -0.016096033
        %v875 = vadd.f32 %v873, -0.016096033
        %v876 = vmul.f32 %v848, %v874
        %v877 = vmul.f32 %v849, %v875
        %v878 = vmul.f32 %v850, -1.45660715e-05
        %v879 = vmul.f32 %v851, -1.45660715e-05
        %v880 = vadd.f32 %v878, -0.00021337405
        %v881 = vadd.f32 %v879, -0.00021337405
        %v882 = vmul.f32 %v850, %v880
        %v883 = vmul.f32 %v851, %v881
        %v884 = vadd.f32 %v882, -0.001682827
        %v885 = vadd.f32 %v883, -0.001682827
        %v886 = vmul.f32 %v850, %v884
        %v887 = vmul.f32 %v851, %v885
        %v888 = vadd.f32 %v886, -0.0073733293
        %v889 = vadd.f32 %v887, -0.0073733293
        %v890 = vmul.f32 %v850, %v888
        %v891 = vmul.f32 %v851, %v889
        %v892 = vadd.f32 %v890, -0.014264739
        %v893 = vadd.f32 %v891, -0.014264739
        %v894 = vrcp.pop %v892
        %v895 = vrcp.pop %v893
        %v896 = vmul.f32 %v876, %v894
        %v897 = vmul.f32 %v877, %v895
        %v898 = vadd.f32 %v896, 1.0
        %v899 = vadd.f32 %v897, 1.0
        %v900 = vmul.f32 %v842, %v898
        %v901 = vmul.f32 %v843, %v899
        %v902 = vld [vmem:[#allocation8] sm:$0xff]
        %903 = vrot.lane.b32.xlu0 %v900, 17
        %v904 = vpop.permute.xlu0 %903
        %905 = vrot.lane.b32.xlu0 %v901, 17
        %v906 = vpop.permute.xlu0 %905
        %v907 = vsel %vm594, %v904, %v906
        %v908 = vsel %vm594, %v906, %v904
        %v909 = vmul.f32 %v908, %v600
        %v910 = vmul.f32 %v907, %v604
        %911 = vrot.lane.b32.xlu0 %v900, 16
        %v912 = vpop.permute.xlu0 %911
        %913 = vrot.lane.b32.xlu0 %v901, 16
        %v914 = vpop.permute.xlu0 %913
        %v915 = vsel %vm611, %v912, %v914
        %v916 = vsel %vm611, %v914, %v912
        %v917 = vmul.f32 %v916, %v617
        %v918 = vmul.f32 %v915, %v621
        %919 = vrot.lane.b32.xlu0 %v900, 15
        %v920 = vpop.permute.xlu0 %919
        %921 = vrot.lane.b32.xlu0 %v901, 15
        %v922 = vpop.permute.xlu0 %921
        %v923 = vsel %vm628, %v920, %v922
        %v924 = vsel %vm628, %v922, %v920
        %v925 = vmul.f32 %v924, %v634
        %v926 = vmul.f32 %v923, %v638
        %927 = vrot.lane.b32.xlu0 %v900, 1
        %v928 = vpop.permute.xlu0 %927
        %929 = vrot.lane.b32.xlu0 %v901, 1
        %v930 = vpop.permute.xlu0 %929
        %v931 = vsel %vm645, %v928, %v930
        %v932 = vsel %vm645, %v930, %v928
        %v933 = vmul.f32 %v932, %v651
        %v934 = vmul.f32 %v931, %v655
        %935 = vrot.lane.b32.xlu0 %v900, 127
        %v936 = vpop.permute.xlu0 %935
        %937 = vrot.lane.b32.xlu0 %v901, 127
        %v938 = vpop.permute.xlu0 %937
        %v939 = vsel %vm662, %v936, %v938
        %v940 = vsel %vm662, %v938, %v936
        %v941 = vmul.f32 %v939, %v668
        %v942 = vmul.f32 %v940, %v672
        %943 = vrot.lane.b32.xlu0 %v900, 113
        %v944 = vpop.permute.xlu0 %943
        %945 = vrot.lane.b32.xlu0 %v901, 113
        %v946 = vpop.permute.xlu0 %945
        %v947 = vsel %vm679, %v944, %v946
        %v948 = vsel %vm679, %v946, %v944
        %v949 = vmul.f32 %v947, %v685
        %v950 = vmul.f32 %v948, %v689
        %951 = vrot.lane.b32.xlu0 %v900, 112
        %v952 = vpop.permute.xlu0 %951
        %953 = vrot.lane.b32.xlu0 %v901, 112
        %v954 = vpop.permute.xlu0 %953
        %v955 = vsel %vm696, %v952, %v954
        %v956 = vsel %vm696, %v954, %v952
        %v957 = vmul.f32 %v955, %v702
        %v958 = vmul.f32 %v956, %v706
        %959 = vrot.lane.b32.xlu0 %v900, 111
        %v960 = vpop.permute.xlu0 %959
        %961 = vrot.lane.b32.xlu0 %v901, 111
        %v962 = vpop.permute.xlu0 %961
        %v963 = vsel %vm713, %v960, %v962
        %v964 = vsel %vm713, %v962, %v960
        %v965 = vmul.f32 %v963, %v719
        %v966 = vmul.f32 %v964, %v723
        %v968 = vsel %vm726, %v902, 0
        %970 = vmatprep.subr.mxu0 0.0
        %971 = vmatpush1.msra.mxu0 0.0
        %972 = vmatprep.subr.mxu0 0.0
        %973 = vmatpush1.msra.mxu0 0.0
        %974 = vmatprep.subr.mxu0 0.0
        %975 = vmatpush1.msra.mxu0 0.0
        %976 = vmatprep.subr.mxu0 0.0
        %977 = vmatpush1.msra.mxu0 0.0
        %978 = vmatprep.subr.mxu0 0.0
        %979 = vmatpush1.msra.mxu0 0.0
        %980 = vmatprep.subr.mxu0 0.0
        %981 = vmatpush1.msra.mxu0 0.0
        %982 = vmatprep.subr.mxu0 0.0
        %983 = vmatpush1.msra.mxu0 0.0
        %984 = vmatprep.subr.mxu0 %v966
        %985 = vmatpush1.msra.mxu0 %v965
        %986 = vmatprep.subr.mxu0 %v958
        %987 = vmatpush1.msra.mxu0 %v957
        %988 = vmatprep.subr.mxu0 %v950
        %989 = vmatpush1.msra.mxu0 %v949
        %990 = vmatprep.subr.mxu0 %v942
        %991 = vmatpush1.msra.mxu0 %v941
        %992 = vmatprep.subr.mxu0 %v901
        %993 = vmatpush1.msra.mxu0 %v900
        %994 = vmatprep.subr.mxu0 %v934
        %995 = vmatpush1.msra.mxu0 %v933
        %996 = vmatprep.subr.mxu0 %v926
        %997 = vmatpush1.msra.mxu0 %v925
        %998 = vmatprep.subr.mxu0 %v918
        %999 = vmatpush1.msra.mxu0 %v917
        %1000 = vmatprep.subr.mxu0 %v910
        %1001 = vmatpush1.msra.mxu0 %v909
        %1002 = vmatprep.subr.mxu0 0.0
        %1003 = vmatpush2.msra.mxu0 0.0
        %1004 = vmatprep.subr.mxu0 0.0
        %1005 = vmatpush2.msra.mxu0 0.0
        %1006 = vmatprep.subr.mxu0 0.0
        %1007 = vmatpush2.msra.mxu0 0.0
        %1008 = vmatprep.subr.mxu0 0.0
        %1009 = vmatpush2.msra.mxu0 0.0
        %1010 = vmatprep.subr.mxu0 0.0
        %1011 = vmatpush2.msra.mxu0 0.0
        %1012 = vmatprep.subr.mxu0 0.0
        %1013 = vmatpush2.msra.mxu0 0.0
        %1014 = vmatprep.subr.mxu0 0.0
        %1015 = vmatpush2.msra.mxu0 0.0
        %1016 = vmatprep.subr.mxu0 0.0
        %1017 = vmatpush2.msra.mxu0 0.0
        %1018 = vmatprep.subr.mxu0 0.0
        %1019 = vmatpush2.msra.mxu0 0.0
        %1020 = vmatprep.subr.mxu0 0.0
        %1021 = vmatpush2.msra.mxu0 0.0
        %1022 = vmatprep.subr.mxu0 0.0
        %1023 = vmatpush2.msra.mxu0 0.0
        %1024 = vmatprep.subr.mxu0 0.0
        %1025 = vmatpush2.msra.mxu0 0.0
        %1026 = vmatprep.subr.mxu0 0.0
        %1027 = vmatpush2.msra.mxu0 0.0
        %1028 = vmatprep.subr.mxu0 0.0
        %1029 = vmatpush2.msra.mxu0 0.0
        %1030 = vmatprep.subr.mxu0 0.0
        %1031 = vmatpush2.msra.mxu0 0.0
        %1032 = vmatprep.subr.mxu0 0.0
        %1033 = vmatpush2.msra.mxu0 0.0
        %1034 = vmatprep.mubr.f32.mxu0 0.0
        %1035 = vmatmul.mubr.f32.gmra.mxu0 %v968
        %v1036 = vpop.f32.mrf.mxu0
        %v1037 = vadd.f32 0.0, %v1036
        %v1038 = vpop.f32.mrf.mxu0
        %v1039 = vadd.f32 0.0, %v1038
        %1040 = vdwg.mxu0
        %v1041 = vadd.f32 %v1037, %v1039
        %1042 = vadd.xlane.f32.xlu0 %v1041
        %v1043 = vpop.xlane.xlu0 %1042
        %v1044 = vrot.slane %v1043, 4
        %v1045 = vadd.f32 %v1043, %v1044
        %v1046 = vrot.slane %v1045, 2
        %v1047 = vadd.f32 %v1045, %v1046
        %v1048 = vrot.slane %v1047, 1
        %v1049 = vadd.f32 %v1047, %v1048
        %v1050 = vmul.f32 %v1049, 0.00048828125
        %v1051 = vsub.f32 %v1037, %v1050
        %v1052 = vsub.f32 %v1039, %v1050
        %v1053 = vmul.f32 %v1051, %v1051
        %v1054 = vmul.f32 %v1052, %v1052
        %v1055 = vadd.f32 %v1053, %v1054
        %1056 = vadd.xlane.f32.xlu0 %v1055
        %v1057 = vpop.xlane.xlu0 %1056
        %v1058 = vrot.slane %v1057, 4
        %v1059 = vadd.f32 %v1057, %v1058
        %v1060 = vrot.slane %v1059, 2
        %v1061 = vadd.f32 %v1059, %v1060
        %v1062 = vrot.slane %v1061, 1
        %v1063 = vadd.f32 %v1061, %v1062
        %v1064 = vmul.f32 %v1063, 0.00048828125
        %v1065 = vadd.f32 %v1064, 1e-05
        %v1066 = vrsqrt.pop %v1065
        %v1067 = vmul.f32 %v1051, %v1066
        %v1068 = vmul.f32 %v1052, %v1066
        %1069 = vset.pattern.permute.xlu0 2
        %1070 = vperm.xlu0 %1069, %v586
        %v1071 = vpop.permute.xlu0 %1070
        %v1073 = vmul.f32 %v1067, %v1071
        %v1074 = vmul.f32 %v1068, %v1071
        %1075 = vset.pattern.permute.xlu0 3
        %1076 = vperm.xlu0 %1075, %v586
        %v1077 = vpop.permute.xlu0 %1076
        %v1079 = vadd.f32 %v1073, %v1077
        %v1080 = vadd.f32 %v1074, %v1077
        %v1081 = vadd.f32 %v584, %v1079
        %v1082 = vadd.f32 %v585, %v1080
        %v1083 = vmul.f32 %v1081, 0.5
        %v1084 = vmul.f32 %v1082, 0.5
        %v1085 = vmul.f32 %v1081, 0.70710677
        %v1086 = vmul.f32 %v1082, 0.70710677
        %v1087 = vmax.f32 %v1085, -4.0
        %v1088 = vmax.f32 %v1086, -4.0
        %v1089 = vmin.f32 %v1087, 4.0
        %v1090 = vmin.f32 %v1088, 4.0
        %v1091 = vmul.f32 %v1089, %v1089
        %v1092 = vmul.f32 %v1090, %v1090
        %v1093 = vmul.f32 %v1091, -2.7261424e-10
        %v1094 = vmul.f32 %v1092, -2.7261424e-10
        %v1095 = vadd.f32 %v1093, 2.7706815e-08
        %v1096 = vadd.f32 %v1094, 2.7706815e-08
        %v1097 = vmul.f32 %v1091, %v1095
        %v1098 = vmul.f32 %v1092, %v1096
        %v1099 = vadd.f32 %v1097, -2.101024e-06
        %v1100 = vadd.f32 %v1098, -2.101024e-06
        %v1101 = vmul.f32 %v1091, %v1099
        %v1102 = vmul.f32 %v1092, %v1100
        %v1103 = vadd.f32 %v1101, -5.6925062e-05
        %v1104 = vadd.f32 %v1102, -5.6925062e-05
        %v1105 = vmul.f32 %v1091, %v1103
        %v1106 = vmul.f32 %v1092, %v1104
        %v1107 = vadd.f32 %v1105, -0.00073499064
        %v1108 = vadd.f32 %v1106, -0.00073499064
        %v1109 = vmul.f32 %v1091, %v1107
        %v1110 = vmul.f32 %v1092, %v1108
        %v1111 = vadd.f32 %v1109, -0.0029546
        %v1112 = vadd.f32 %v1110, -0.0029546
        %v1113 = vmul.f32 %v1091, %v1111
        %v1114 = vmul.f32 %v1092, %v1112
        %v1115 = vadd.f32 %v1113, -0.016096033
        %v1116 = vadd.f32 %v1114, -0.016096033
        %v1117 = vmul.f32 %v1089, %v1115
        %v1118 = vmul.f32 %v1090, %v1116
        %v1119 = vmul.f32 %v1091, -1.45660715e-05
        %v1120 = vmul.f32 %v1092, -1.45660715e-05
        %v1121 = vadd.f32 %v1119, -0.00021337405
        %v1122 = vadd.f32 %v1120, -0.00021337405
        %v1123 = vmul.f32 %v1091, %v1121
        %v1124 = vmul.f32 %v1092, %v1122
        %v1125 = vadd.f32 %v1123, -0.001682827
        %v1126 = vadd.f32 %v1124, -0.001682827
        %v1127 = vmul.f32 %v1091, %v1125
        %v1128 = vmul.f32 %v1092, %v1126
        %v1129 = vadd.f32 %v1127, -0.0073733293
        %v1130 = vadd.f32 %v1128, -0.0073733293
        %v1131 = vmul.f32 %v1091, %v1129
        %v1132 = vmul.f32 %v1092, %v1130
        %v1133 = vadd.f32 %v1131, -0.014264739
        %v1134 = vadd.f32 %v1132, -0.014264739
        %v1135 = vrcp.pop %v1133
        %v1136 = vrcp.pop %v1134
        %v1137 = vmul.f32 %v1117, %v1135
        %v1138 = vmul.f32 %v1118, %v1136
        %v1139 = vadd.f32 %v1137, 1.0
        %v1140 = vadd.f32 %v1138, 1.0
        %v1141 = vmul.f32 %v1083, %v1139
        %v1142 = vmul.f32 %v1084, %v1140
        %v1143 = vld [vmem:[#allocation10] sm:$0xf]
        %1144 = vrot.lane.b32.xlu0 %v1141, 17
        %v1145 = vpop.permute.xlu0 %1144
        %1146 = vrot.lane.b32.xlu0 %v1142, 17
        %v1147 = vpop.permute.xlu0 %1146
        %v1148 = vsel %vm594, %v1145, %v1147
        %v1149 = vsel %vm594, %v1147, %v1145
        %v1150 = vmul.f32 %v1149, %v600
        %v1151 = vmul.f32 %v1148, %v604
        %1152 = vrot.lane.b32.xlu0 %v1141, 16
        %v1153 = vpop.permute.xlu0 %1152
        %1154 = vrot.lane.b32.xlu0 %v1142, 16
        %v1155 = vpop.permute.xlu0 %1154
        %v1156 = vsel %vm611, %v1153, %v1155
        %v1157 = vsel %vm611, %v1155, %v1153
        %v1158 = vmul.f32 %v1157, %v617
        %v1159 = vmul.f32 %v1156, %v621
        %1160 = vrot.lane.b32.xlu0 %v1141, 15
        %v1161 = vpop.permute.xlu0 %1160
        %1162 = vrot.lane.b32.xlu0 %v1142, 15
        %v1163 = vpop.permute.xlu0 %1162
        %v1164 = vsel %vm628, %v1161, %v1163
        %v1165 = vsel %vm628, %v1163, %v1161
        %v1166 = vmul.f32 %v1165, %v634
        %v1167 = vmul.f32 %v1164, %v638
        %1168 = vrot.lane.b32.xlu0 %v1141, 1
        %v1169 = vpop.permute.xlu0 %1168
        %1170 = vrot.lane.b32.xlu0 %v1142, 1
        %v1171 = vpop.permute.xlu0 %1170
        %v1172 = vsel %vm645, %v1169, %v1171
        %v1173 = vsel %vm645, %v1171, %v1169
        %v1174 = vmul.f32 %v1173, %v651
        %v1175 = vmul.f32 %v1172, %v655
        %1176 = vrot.lane.b32.xlu0 %v1141, 127
        %v1177 = vpop.permute.xlu0 %1176
        %1178 = vrot.lane.b32.xlu0 %v1142, 127
        %v1179 = vpop.permute.xlu0 %1178
        %v1180 = vsel %vm662, %v1177, %v1179
        %v1181 = vsel %vm662, %v1179, %v1177
        %v1182 = vmul.f32 %v1180, %v668
        %v1183 = vmul.f32 %v1181, %v672
        %1184 = vrot.lane.b32.xlu0 %v1141, 113
        %v1185 = vpop.permute.xlu0 %1184
        %1186 = vrot.lane.b32.xlu0 %v1142, 113
        %v1187 = vpop.permute.xlu0 %1186
        %v1188 = vsel %vm679, %v1185, %v1187
        %v1189 = vsel %vm679, %v1187, %v1185
        %v1190 = vmul.f32 %v1188, %v685
        %v1191 = vmul.f32 %v1189, %v689
        %1192 = vrot.lane.b32.xlu0 %v1141, 112
        %v1193 = vpop.permute.xlu0 %1192
        %1194 = vrot.lane.b32.xlu0 %v1142, 112
        %v1195 = vpop.permute.xlu0 %1194
        %v1196 = vsel %vm696, %v1193, %v1195
        %v1197 = vsel %vm696, %v1195, %v1193
        %v1198 = vmul.f32 %v1196, %v702
        %v1199 = vmul.f32 %v1197, %v706
        %1200 = vrot.lane.b32.xlu0 %v1141, 111
        %v1201 = vpop.permute.xlu0 %1200
        %1202 = vrot.lane.b32.xlu0 %v1142, 111
        %v1203 = vpop.permute.xlu0 %1202
        %v1204 = vsel %vm713, %v1201, %v1203
        %v1205 = vsel %vm713, %v1203, %v1201
        %v1206 = vmul.f32 %v1204, %v719
        %v1207 = vmul.f32 %v1205, %v723
        %v1209 = vsel %vm726, %v1143, 0
        %1211 = vmatprep.subr.mxu0 0.0
        %1212 = vmatpush1.msra.mxu0 0.0
        %1213 = vmatprep.subr.mxu0 0.0
        %1214 = vmatpush1.msra.mxu0 0.0
        %1215 = vmatprep.subr.mxu0 0.0
        %1216 = vmatpush1.msra.mxu0 0.0
        %1217 = vmatprep.subr.mxu0 0.0
        %1218 = vmatpush1.msra.mxu0 0.0
        %1219 = vmatprep.subr.mxu0 0.0
        %1220 = vmatpush1.msra.mxu0 0.0
        %1221 = vmatprep.subr.mxu0 0.0
        %1222 = vmatpush1.msra.mxu0 0.0
        %1223 = vmatprep.subr.mxu0 0.0
        %1224 = vmatpush1.msra.mxu0 0.0
        %1225 = vmatprep.subr.mxu0 %v1207
        %1226 = vmatpush1.msra.mxu0 %v1206
        %1227 = vmatprep.subr.mxu0 %v1199
        %1228 = vmatpush1.msra.mxu0 %v1198
        %1229 = vmatprep.subr.mxu0 %v1191
        %1230 = vmatpush1.msra.mxu0 %v1190
        %1231 = vmatprep.subr.mxu0 %v1183
        %1232 = vmatpush1.msra.mxu0 %v1182
        %1233 = vmatprep.subr.mxu0 %v1142
        %1234 = vmatpush1.msra.mxu0 %v1141
        %1235 = vmatprep.subr.mxu0 %v1175
        %1236 = vmatpush1.msra.mxu0 %v1174
        %1237 = vmatprep.subr.mxu0 %v1167
        %1238 = vmatpush1.msra.mxu0 %v1166
        %1239 = vmatprep.subr.mxu0 %v1159
        %1240 = vmatpush1.msra.mxu0 %v1158
        %1241 = vmatprep.subr.mxu0 %v1151
        %1242 = vmatpush1.msra.mxu0 %v1150
        %1243 = vmatprep.subr.mxu0 0.0
        %1244 = vmatpush2.msra.mxu0 0.0
        %1245 = vmatprep.subr.mxu0 0.0
        %1246 = vmatpush2.msra.mxu0 0.0
        %1247 = vmatprep.subr.mxu0 0.0
        %1248 = vmatpush2.msra.mxu0 0.0
        %1249 = vmatprep.subr.mxu0 0.0
        %1250 = vmatpush2.msra.mxu0 0.0
        %1251 = vmatprep.subr.mxu0 0.0
        %1252 = vmatpush2.msra.mxu0 0.0
        %1253 = vmatprep.subr.mxu0 0.0
        %1254 = vmatpush2.msra.mxu0 0.0
        %1255 = vmatprep.subr.mxu0 0.0
        %1256 = vmatpush2.msra.mxu0 0.0
        %1257 = vmatprep.subr.mxu0 0.0
        %1258 = vmatpush2.msra.mxu0 0.0
        %1259 = vmatprep.subr.mxu0 0.0
        %1260 = vmatpush2.msra.mxu0 0.0
        %1261 = vmatprep.subr.mxu0 0.0
        %1262 = vmatpush2.msra.mxu0 0.0
        %1263 = vmatprep.subr.mxu0 0.0
        %1264 = vmatpush2.msra.mxu0 0.0
        %1265 = vmatprep.subr.mxu0 0.0
        %1266 = vmatpush2.msra.mxu0 0.0
        %1267 = vmatprep.subr.mxu0 0.0
        %1268 = vmatpush2.msra.mxu0 0.0
        %1269 = vmatprep.subr.mxu0 0.0
        %1270 = vmatpush2.msra.mxu0 0.0
        %1271 = vmatprep.subr.mxu0 0.0
        %1272 = vmatpush2.msra.mxu0 0.0
        %1273 = vmatprep.subr.mxu0 0.0
        %1274 = vmatpush2.msra.mxu0 0.0
        %1275 = vmatprep.mubr.f32.mxu0 0.0
        %1276 = vmatmul.mubr.f32.gmra.mxu0 %v1209
        %v1277 = vpop.f32.mrf.mxu0
        %v1278 = vadd.f32 0.0, %v1277
        %v1279 = vpop.f32.mrf.mxu0
        %v1280 = vadd.f32 0.0, %v1279
        %1281 = vdwg.mxu0
        %v1282 = vsel %vm583, %v1278, 0.0
        %v1283 = vsel %vm583, %v1280, 0.0
        %v1284 = vadd.f32 %v1282, %v1283
        %1285 = vadd.xlane.f32.xlu0 %v1284
        %v1286 = vpop.xlane.xlu0 %1285
        %v1287 = vsel %vm583, %v1286, 0.0
        %v1288 = vrot.slane %v1287, 4
        %v1289 = vadd.f32 %v1287, %v1288
        %v1290 = vrot.slane %v1289, 2
        %v1291 = vadd.f32 %v1289, %v1290
        %v1292 = vrot.slane %v1291, 1
        %v1293 = vadd.f32 %v1291, %v1292
        %v1294 = vmul.f32 %v1293, 0.0009765625
        %v1295 = vsub.f32 %v1278, %v1294
        %v1296 = vsub.f32 %v1280, %v1294
        %v1297 = vmul.f32 %v1295, %v1295
        %v1298 = vmul.f32 %v1296, %v1296
        %v1299 = vsel %vm583, %v1297, 0.0
        %v1300 = vsel %vm583, %v1298, 0.0
        %v1301 = vadd.f32 %v1299, %v1300
        %1302 = vadd.xlane.f32.xlu0 %v1301
        %v1303 = vpop.xlane.xlu0 %1302
        %v1304 = vsel %vm583, %v1303, 0.0
        %v1305 = vrot.slane %v1304, 4
        %v1306 = vadd.f32 %v1304, %v1305
        %v1307 = vrot.slane %v1306, 2
        %v1308 = vadd.f32 %v1306, %v1307
        %v1309 = vrot.slane %v1308, 1
        %v1310 = vadd.f32 %v1308, %v1309
        %v1311 = vmul.f32 %v1310, 0.0009765625
        %v1312 = vadd.f32 %v1311, 1e-05
        %v1313 = vrsqrt.pop %v1312
        %v1314 = vmul.f32 %v1295, %v1313
        %v1315 = vmul.f32 %v1296, %v1313
        %1316 = vset.pattern.permute.xlu0 4
        %1317 = vperm.xlu0 %1316, %v586
        %v1318 = vpop.permute.xlu0 %1317
        %v1320 = vmul.f32 %v1314, %v1318
        %v1321 = vmul.f32 %v1315, %v1318
        %1322 = vset.pattern.permute.xlu0 5
        %1323 = vperm.xlu0 %1322, %v586
        %v1324 = vpop.permute.xlu0 %1323
        %v1326 = vadd.f32 %v1320, %v1324
        %v1327 = vadd.f32 %v1321, %v1324
        %v1328 = vmul.f32 %v1326, 0.5
        %v1329 = vmul.f32 %v1327, 0.5
        %v1330 = vmul.f32 %v1326, 0.70710677
        %v1331 = vmul.f32 %v1327, 0.70710677
        %v1332 = vmax.f32 %v1330, -4.0
        %v1333 = vmax.f32 %v1331, -4.0
        %v1334 = vmin.f32 %v1332, 4.0
        %v1335 = vmin.f32 %v1333, 4.0
        %v1336 = vmul.f32 %v1334, %v1334
        %v1337 = vmul.f32 %v1335, %v1335
        %v1338 = vmul.f32 %v1336, -2.7261424e-10
        %v1339 = vmul.f32 %v1337, -2.7261424e-10
        %v1340 = vadd.f32 %v1338, 2.7706815e-08
        %v1341 = vadd.f32 %v1339, 2.7706815e-08
        %v1342 = vmul.f32 %v1336, %v1340
        %v1343 = vmul.f32 %v1337, %v1341
        %v1344 = vadd.f32 %v1342, -2.101024e-06
        %v1345 = vadd.f32 %v1343, -2.101024e-06
        %v1346 = vmul.f32 %v1336, %v1344
        %v1347 = vmul.f32 %v1337, %v1345
        %v1348 = vadd.f32 %v1346, -5.6925062e-05
        %v1349 = vadd.f32 %v1347, -5.6925062e-05
        %v1350 = vmul.f32 %v1336, %v1348
        %v1351 = vmul.f32 %v1337, %v1349
        %v1352 = vadd.f32 %v1350, -0.00073499064
        %v1353 = vadd.f32 %v1351, -0.00073499064
        %v1354 = vmul.f32 %v1336, %v1352
        %v1355 = vmul.f32 %v1337, %v1353
        %v1356 = vadd.f32 %v1354, -0.0029546
        %v1357 = vadd.f32 %v1355, -0.0029546
        %v1358 = vmul.f32 %v1336, %v1356
        %v1359 = vmul.f32 %v1337, %v1357
        %v1360 = vadd.f32 %v1358, -0.016096033
        %v1361 = vadd.f32 %v1359, -0.016096033
        %v1362 = vmul.f32 %v1334, %v1360
        %v1363 = vmul.f32 %v1335, %v1361
        %v1364 = vmul.f32 %v1336, -1.45660715e-05
        %v1365 = vmul.f32 %v1337, -1.45660715e-05
        %v1366 = vadd.f32 %v1364, -0.00021337405
        %v1367 = vadd.f32 %v1365, -0.00021337405
        %v1368 = vmul.f32 %v1336, %v1366
        %v1369 = vmul.f32 %v1337, %v1367
        %v1370 = vadd.f32 %v1368, -0.001682827
        %v1371 = vadd.f32 %v1369, -0.001682827
        %v1372 = vmul.f32 %v1336, %v1370
        %v1373 = vmul.f32 %v1337, %v1371
        %v1374 = vadd.f32 %v1372, -0.0073733293
        %v1375 = vadd.f32 %v1373, -0.0073733293
        %v1376 = vmul.f32 %v1336, %v1374
        %v1377 = vmul.f32 %v1337, %v1375
        %v1378 = vadd.f32 %v1376, -0.014264739
        %v1379 = vadd.f32 %v1377, -0.014264739
        %v1380 = vrcp.pop %v1378
        %v1381 = vrcp.pop %v1379
        %v1382 = vmul.f32 %v1362, %v1380
        %v1383 = vmul.f32 %v1363, %v1381
        %v1384 = vadd.f32 %v1382, 1.0
        %v1385 = vadd.f32 %v1383, 1.0
        %v1386 = vmul.f32 %v1328, %v1384
        %v1387 = vmul.f32 %v1329, %v1385
        %v1388 = vld [vmem:[#allocation11] sm:$0xf]
        %1389 = vrot.lane.b32.xlu0 %v1386, 17
        %v1390 = vpop.permute.xlu0 %1389
        %1391 = vrot.lane.b32.xlu0 %v1387, 17
        %v1392 = vpop.permute.xlu0 %1391
        %v1393 = vsel %vm594, %v1390, %v1392
        %v1394 = vsel %vm594, %v1392, %v1390
        %v1395 = vmul.f32 %v1394, %v600
        %v1396 = vmul.f32 %v1393, %v604
        %1397 = vrot.lane.b32.xlu0 %v1386, 16
        %v1398 = vpop.permute.xlu0 %1397
        %1399 = vrot.lane.b32.xlu0 %v1387, 16
        %v1400 = vpop.permute.xlu0 %1399
        %v1401 = vsel %vm611, %v1398, %v1400
        %v1402 = vsel %vm611, %v1400, %v1398
        %v1403 = vmul.f32 %v1402, %v617
        %v1404 = vmul.f32 %v1401, %v621
        %1405 = vrot.lane.b32.xlu0 %v1386, 15
        %v1406 = vpop.permute.xlu0 %1405
        %1407 = vrot.lane.b32.xlu0 %v1387, 15
        %v1408 = vpop.permute.xlu0 %1407
        %v1409 = vsel %vm628, %v1406, %v1408
        %v1410 = vsel %vm628, %v1408, %v1406
        %v1411 = vmul.f32 %v1410, %v634
        %v1412 = vmul.f32 %v1409, %v638
        %1413 = vrot.lane.b32.xlu0 %v1386, 1
        %v1414 = vpop.permute.xlu0 %1413
        %1415 = vrot.lane.b32.xlu0 %v1387, 1
        %v1416 = vpop.permute.xlu0 %1415
        %v1417 = vsel %vm645, %v1414, %v1416
        %v1418 = vsel %vm645, %v1416, %v1414
        %v1419 = vmul.f32 %v1418, %v651
        %v1420 = vmul.f32 %v1417, %v655
        %1421 = vrot.lane.b32.xlu0 %v1386, 127
        %v1422 = vpop.permute.xlu0 %1421
        %1423 = vrot.lane.b32.xlu0 %v1387, 127
        %v1424 = vpop.permute.xlu0 %1423
        %v1425 = vsel %vm662, %v1422, %v1424
        %v1426 = vsel %vm662, %v1424, %v1422
        %v1427 = vmul.f32 %v1425, %v668
        %v1428 = vmul.f32 %v1426, %v672
        %1429 = vrot.lane.b32.xlu0 %v1386, 113
        %v1430 = vpop.permute.xlu0 %1429
        %1431 = vrot.lane.b32.xlu0 %v1387, 113
        %v1432 = vpop.permute.xlu0 %1431
        %v1433 = vsel %vm679, %v1430, %v1432
        %v1434 = vsel %vm679, %v1432, %v1430
        %v1435 = vmul.f32 %v1433, %v685
        %v1436 = vmul.f32 %v1434, %v689
        %1437 = vrot.lane.b32.xlu0 %v1386, 112
        %v1438 = vpop.permute.xlu0 %1437
        %1439 = vrot.lane.b32.xlu0 %v1387, 112
        %v1440 = vpop.permute.xlu0 %1439
        %v1441 = vsel %vm696, %v1438, %v1440
        %v1442 = vsel %vm696, %v1440, %v1438
        %v1443 = vmul.f32 %v1441, %v702
        %v1444 = vmul.f32 %v1442, %v706
        %1445 = vrot.lane.b32.xlu0 %v1386, 111
        %v1446 = vpop.permute.xlu0 %1445
        %1447 = vrot.lane.b32.xlu0 %v1387, 111
        %v1448 = vpop.permute.xlu0 %1447
        %v1449 = vsel %vm713, %v1446, %v1448
        %v1450 = vsel %vm713, %v1448, %v1446
        %v1451 = vmul.f32 %v1449, %v719
        %v1452 = vmul.f32 %v1450, %v723
        %v1455 = vrot.slane %v1403, 4
        %v1456 = vrot.slane %v1404, 4
        %v1461 = vrot.slane %v1419, 4
        %v1462 = vrot.slane %v1420, 4
        %v1467 = vrot.slane %v1427, 4
        %v1468 = vrot.slane %v1428, 4
        %v1473 = vrot.slane %v1443, 4
        %v1474 = vrot.slane %v1444, 4
        %v1477 = vsel %vm583, %v1395, %v1455
        %v1478 = vsel %vm583, %v1396, %v1456
        %v1479 = vsel %vm583, %v1411, %v1461
        %v1480 = vsel %vm583, %v1412, %v1462
        %v1481 = vsel %vm583, %v1386, %v1467
        %v1482 = vsel %vm583, %v1387, %v1468
        %v1483 = vsel %vm583, %v1435, %v1473
        %v1484 = vsel %vm583, %v1436, %v1474
        %vm1485 = vcmask 293888
        %v1487 = vsel %vm1485, %v1388, 0
        %v1490 = vsel %vm583, %v1451, 0
        %v1493 = vsel %vm583, %v1452, 0
        %1495 = vmatprep.subr.mxu0 0.0
        %1496 = vmatpush1.msra.mxu0 0.0
        %1497 = vmatprep.subr.mxu0 0.0
        %1498 = vmatpush1.msra.mxu0 0.0
        %1499 = vmatprep.subr.mxu0 0.0
        %1500 = vmatpush1.msra.mxu0 0.0
        %1501 = vmatprep.subr.mxu0 0.0
        %1502 = vmatpush1.msra.mxu0 0.0
        %1503 = vmatprep.subr.mxu0 0.0
        %1504 = vmatpush1.msra.mxu0 0.0
        %1505 = vmatprep.subr.mxu0 0.0
        %1506 = vmatpush1.msra.mxu0 0.0
        %1507 = vmatprep.subr.mxu0 0.0
        %1508 = vmatpush1.msra.mxu0 0.0
        %1509 = vmatprep.subr.mxu0 0.0
        %1510 = vmatpush1.msra.mxu0 0.0
        %1511 = vmatprep.subr.mxu0 0.0
        %1512 = vmatpush1.msra.mxu0 0.0
        %1513 = vmatprep.subr.mxu0 0.0
        %1514 = vmatpush1.msra.mxu0 0.0
        %1515 = vmatprep.subr.mxu0 0.0
        %1516 = vmatpush1.msra.mxu0 0.0
        %1517 = vmatprep.subr.mxu0 %v1493
        %1518 = vmatpush1.msra.mxu0 %v1490
        %1519 = vmatprep.subr.mxu0 %v1484
        %1520 = vmatpush1.msra.mxu0 %v1483
        %1521 = vmatprep.subr.mxu0 %v1482
        %1522 = vmatpush1.msra.mxu0 %v1481
        %1523 = vmatprep.subr.mxu0 %v1480
        %1524 = vmatpush1.msra.mxu0 %v1479
        %1525 = vmatprep.subr.mxu0 %v1478
        %1526 = vmatpush1.msra.mxu0 %v1477
        %1527 = vmatprep.subr.mxu0 0.0
        %1528 = vmatpush2.msra.mxu0 0.0
        %1529 = vmatprep.subr.mxu0 0.0
        %1530 = vmatpush2.msra.mxu0 0.0
        %1531 = vmatprep.subr.mxu0 0.0
        %1532 = vmatpush2.msra.mxu0 0.0
        %1533 = vmatprep.subr.mxu0 0.0
        %1534 = vmatpush2.msra.mxu0 0.0
        %1535 = vmatprep.subr.mxu0 0.0
        %1536 = vmatpush2.msra.mxu0 0.0
        %1537 = vmatprep.subr.mxu0 0.0
        %1538 = vmatpush2.msra.mxu0 0.0
        %1539 = vmatprep.subr.mxu0 0.0
        %1540 = vmatpush2.msra.mxu0 0.0
        %1541 = vmatprep.subr.mxu0 0.0
        %1542 = vmatpush2.msra.mxu0 0.0
        %1543 = vmatprep.subr.mxu0 0.0
        %1544 = vmatpush2.msra.mxu0 0.0
        %1545 = vmatprep.subr.mxu0 0.0
        %1546 = vmatpush2.msra.mxu0 0.0
        %1547 = vmatprep.subr.mxu0 0.0
        %1548 = vmatpush2.msra.mxu0 0.0
        %1549 = vmatprep.subr.mxu0 0.0
        %1550 = vmatpush2.msra.mxu0 0.0
        %1551 = vmatprep.subr.mxu0 0.0
        %1552 = vmatpush2.msra.mxu0 0.0
        %1553 = vmatprep.subr.mxu0 0.0
        %1554 = vmatpush2.msra.mxu0 0.0
        %1555 = vmatprep.subr.mxu0 0.0
        %1556 = vmatpush2.msra.mxu0 0.0
        %1557 = vmatprep.subr.mxu0 0.0
        %1558 = vmatpush2.msra.mxu0 0.0
        %1559 = vmatprep.mubr.f32.mxu0 0.0
        %1560 = vmatmul.mubr.f32.gmra.mxu0 %v1487
        %v1561 = vpop.f32.mrf.mxu0
        %v1562 = vadd.f32 0.0, %v1561
        %v1563 = vpop.f32.mrf.mxu0
        %v1564 = vadd.f32 0.0, %v1563
        %1565 = vdwg.mxu0
        %v1566 = vsel %vm583, %v1562, 0.0
        %v1567 = vsel %vm583, %v1564, 0.0
        %v1568 = vadd.f32 %v1566, %v1567
        %1569 = vadd.xlane.f32.xlu0 %v1568
        %v1570 = vpop.xlane.xlu0 %1569
        %v1571 = vsel %vm583, %v1570, 0.0
        %v1572 = vrot.slane %v1571, 4
        %v1573 = vadd.f32 %v1571, %v1572
        %v1574 = vrot.slane %v1573, 2
        %v1575 = vadd.f32 %v1573, %v1574
        %v1576 = vrot.slane %v1575, 1
        %v1577 = vadd.f32 %v1575, %v1576
        %v1578 = vmul.f32 %v1577, 0.0009765625
        %v1579 = vsub.f32 %v1562, %v1578
        %v1580 = vsub.f32 %v1564, %v1578
        %v1581 = vmul.f32 %v1579, %v1579
        %v1582 = vmul.f32 %v1580, %v1580
        %v1583 = vsel %vm583, %v1581, 0.0
        %v1584 = vsel %vm583, %v1582, 0.0
        %v1585 = vadd.f32 %v1583, %v1584
        %1586 = vadd.xlane.f32.xlu0 %v1585
        %v1587 = vpop.xlane.xlu0 %1586
        %v1588 = vsel %vm583, %v1587, 0.0
        %v1589 = vrot.slane %v1588, 4
        %v1590 = vadd.f32 %v1588, %v1589
        %v1591 = vrot.slane %v1590, 2
        %v1592 = vadd.f32 %v1590, %v1591
        %v1593 = vrot.slane %v1592, 1
        %v1594 = vadd.f32 %v1592, %v1593
        %v1595 = vmul.f32 %v1594, 0.0009765625
        %v1596 = vadd.f32 %v1595, 1e-05
        %v1597 = vrsqrt.pop %v1596
        %v1598 = vmul.f32 %v1579, %v1597
        %v1599 = vmul.f32 %v1580, %v1597
        %1600 = vset.pattern.permute.xlu0 6
        %1601 = vperm.xlu0 %1600, %v586
        %v1602 = vpop.permute.xlu0 %1601
        %v1604 = vmul.f32 %v1598, %v1602
        %v1605 = vmul.f32 %v1599, %v1602
        %1606 = vset.pattern.permute.xlu0 7
        %1607 = vperm.xlu0 %1606, %v586
        %v1608 = vpop.permute.xlu0 %1607
        %v1610 = vadd.f32 %v1604, %v1608
        %v1611 = vadd.f32 %v1605, %v1608
        %v1612 = vld [vmem:[%s476] sm:$0xf]
        %1614 = vset.pattern.permute.xlu0 0
        %1615 = vperm.xlu0 %1614, %v1612
        %v1616 = vpop.permute.xlu0 %1615
        %v1618 = vmul.f32 %v1616, %v1610
        %v1619 = vmul.f32 %v1616, %v1611
        %1620 = vset.pattern.permute.xlu0 1
        %1621 = vperm.xlu0 %1620, %v1612
        %v1622 = vpop.permute.xlu0 %1621
        %v1624 = vadd.f32 %v1618, %v1622
        %v1625 = vadd.f32 %v1619, %v1622
        %v1628 = vcombine.low %v1624, %v1625
        %1630 = vst [vmem:[%s468] sm:$0xff] %v1628
        %s1631 = sand.u32 %s263, 1
        %s1632 = scalar_lea.sflag [#allocation4], %s1631
        %s1633 = sand.u32 %s263, 1
        %s1634 = smul.addr %s1633, 8
        %s1635 = scalar_lea.vmem [#allocation13], %s1634
        // Predicated region
        $region85: #{tpu_custom_call.1} parent=59 // pred_check
          %p1636 = pneg %p273
        $region86: #{tpu_custom_call.1} parent=59 // pred_check_branch
          %1638 = sbr.rel (%p1636) target = $region88
        $region87: #{tpu_custom_call.1} parent=59 // pred_region
          %s1640 = ssub.s32 128, 128
          %1641 = vsyncadd %s1632, %s1640
          %s1642 = smul.addr %s30, 2
          %s1643 = smul.addr %s1642, 64
          %s1644 = scalar_lea.hbm %s10, %s1643
          %s1646 = sshll.u32 %s1635, 4
          %s1647 = int_to_ptr.vmem [resolvable:$true] %s1646
          %1649 = dma.vmem_to_hbm [thread:$0]  %s1647, 128, %s1644, %s1632
        $region88: #{tpu_custom_call.1} parent=59 // pred_fallthru
          _
      $region60: #{tpu_custom_call.1} parent=5 // pred_fallthru
        _
      %p1650 = scmp.le.s32.totalorder 2, %s25
      // Predicated region
      $region89: #{tpu_custom_call.1} parent=5 // pred_check
        %p1651 = pneg %p1650
      $region90: #{tpu_custom_call.1} parent=5 // pred_check_branch
        %1653 = sbr.rel (%p1651) target = $region92
      $region91: #{tpu_custom_call.1} parent=5 // pred_region
        %s1654 = ssub.s32 %s25, 2
        // Predicated region
        $region93: #{tpu_custom_call.1} parent=91 // pred_check
          %p1655 = pneg %p279
        $region94: #{tpu_custom_call.1} parent=91 // pred_check_branch
          %1657 = sbr.rel (%p1655) target = $region96
        $region95: #{tpu_custom_call.1} parent=91 // pred_region
          %s1658 = sand.u32 %s264, 1
          %s1659 = scalar_lea.sflag [#allocation4], %s1658
          %s1660 = sand.u32 %s264, 1
          %s1661 = smul.addr %s1660, 8
          %s1662 = scalar_lea.vmem [#allocation13], %s1661
          %1663 = dma.done %s1659, 128
        $region96: #{tpu_custom_call.1} parent=91 // pred_fallthru
          _
      $region92: #{tpu_custom_call.1} parent=5 // pred_fallthru
        _
    $region6: #{tpu_custom_call.1} parent=1 // loop_footer
      %s29 = sadd.s32 1, %s25
    $region7: #{tpu_custom_call.1} parent=1 // loop_footer_branch
      %24 = sbr.rel target = $region3
    $region8: #{tpu_custom_call.1} parent=1 // loop_exit
      _
    %1664 = vsyncpa [#allocation3], 1
    %s1665 = scalar_lea.sflag [#allocation3], 1
    %1666 = vsyncpa %s1665, 1
    %1667 = vsyncpa [#allocation6], 1
    %1668 = vsyncpa [#allocation9], 1
    %1669 = vsyncpa [#allocation12], 1
    %1670 = vsyncpa [#allocation4], 1
    %s1671 = scalar_lea.sflag [#allocation4], 1
    %1672 = vsyncpa %s1671, 1

</llo_original>
